<compile_context>
chip_gen: v5e
topology: v5e:2x2
jax: 0.10.0
libtpu: 0.0.40
codegen_flags: <defaults>
</compile_context>

<pallas_src>
import jax
import jax.numpy as jnp
from jax.experimental import pallas as pl
from jax.experimental.pallas import tpu as pltpu


def _round_up(x, m):
    return ((x + m - 1) // m) * m


def _make_expr_nll_kernel(N, G, tn, tg):
    """Kernel factory; emits remainder-masking code only when needed, and only
    executes it on edge tiles (pl.when gated)."""
    need_row_mask = (N % tn) != 0
    need_col_mask = (G % tg) != 0
    n_lane_blocks = tg // 128   # tg is a multiple of 128 by construction
    n_sub_blocks = tn // 8      # tn is a multiple of 16 by construction

    def _fold_lanes(t):
        # (tn, tg) -> (tn, 128): sum lane-aligned 128-wide column blocks.
        # Slices are exactly vreg-column aligned -> no relayout, pure VPU adds.
        folded = t[:, 0:128]
        for c in range(1, n_lane_blocks):
            folded = folded + t[:, c * 128:(c + 1) * 128]
        return folded

    def kernel(x_ref, w_ref, y_ref, o_ref, acc_ref):
        i = pl.program_id(0)   # cell tile ("parallel")
        j = pl.program_id(1)   # gene tile (reduction axis, innermost)

        @pl.when(j == 0)
        def _init():
            acc_ref[...] = jnp.zeros_like(acc_ref)

        # Resident-W gene tile: pure VMEM slice, 128-lane aligned.
        jw = pl.multiple_of(j * tg, 128)
        w_tile = w_ref[:, pl.ds(jw, tg)]

        # Fused linear predictor (one thin MXU push per tile):
        #   log_mu = [lat|cc|bat|1|log_sf] @ [W;C;B;bias;1]
        log_mu = jnp.dot(x_ref[...], w_tile, preferred_element_type=jnp.float32)
        y = y_ref[...].astype(jnp.float32)           # 16-bit stream -> f32
        term = jnp.exp(log_mu) - y * log_mu          # Poisson NLL (no log y!)

        preds = []
        if need_row_mask:
            preds.append(i == pl.num_programs(0) - 1)
        if need_col_mask:
            preds.append(j == pl.num_programs(1) - 1)

        if preds:
            is_edge = preds[0]
            for p in preds[1:]:
                is_edge = jnp.logical_or(is_edge, p)

            @pl.when(is_edge)
            def _masked_acc():
                mask = None
                if need_row_mask:
                    rows = jax.lax.broadcasted_iota(jnp.int32, (tn, tg), 0) + i * tn
                    mask = rows < N
                if need_col_mask:
                    cols = jax.lax.broadcasted_iota(jnp.int32, (tn, tg), 1) + j * tg
                    cmask = cols < G
                    mask = cmask if mask is None else jnp.logical_and(mask, cmask)
                acc_ref[...] += _fold_lanes(jnp.where(mask, term, 0.0))

            @pl.when(jnp.logical_not(is_edge))
            def _plain_acc():
                acc_ref[...] += _fold_lanes(term)
        else:
            acc_ref[...] += _fold_lanes(term)

        # Once per row tile: fold (tn,128) -> (8,128) with sublane-aligned VPU
        # adds only (no cross-lane reduce) and write a lane-dense partial block.
        @pl.when(j == pl.num_programs(1) - 1)
        def _finalize():
            a = acc_ref[...]
            out = a[0:8, :]
            for b in range(1, n_sub_blocks):
                out = out + a[b * 8:(b + 1) * 8, :]
            o_ref[...] = out[None, :, :]

    return kernel


def _expr_poisson_nll(X, W, Y, *, tn, tg):
    """sum_{cells,genes} [ exp(log_mu) - y*log_mu ] with log_mu = X @ W."""
    N, G = Y.shape
    K_pad = X.shape[1]

    tn_eff = min(_round_up(tn, 16), _round_up(N, 16))     # 16: bf16 sublane pack
    tg_eff = min(_round_up(tg, 128), _round_up(G, 128))   # lane multiple
    grid = (pl.cdiv(N, tn_eff), pl.cdiv(G, tg_eff))

    # Pad W's gene axis so the in-kernel resident-W slice never goes OOB.
    G_pad = grid[1] * tg_eff
    if G_pad != G:
        W = jnp.concatenate([W, jnp.zeros((K_pad, G_pad - G), W.dtype)], axis=1)

    kernel = _make_expr_nll_kernel(N, G, tn_eff, tg_eff)

    partials = pl.pallas_call(
        kernel,
        out_shape=jax.ShapeDtypeStruct((grid[0], 8, 128), jnp.float32),
        grid_spec=pltpu.PrefetchScalarGridSpec(
            num_scalar_prefetch=0,
            grid=grid,
            in_specs=[
                # X = [lat | cc | batch | 1 | log_sf]  (per row tile)
                pl.BlockSpec((tn_eff, K_pad), lambda i, j: (i, 0)),
                # W = [W; C; B; bias; 1]: fully VMEM-resident (constant index),
                # gene tile sliced in-kernel.
                pl.BlockSpec((K_pad, G_pad), lambda i, j: (0, 0)),
                # expr counts, 16-bit stream (the only O(N*G) HBM read).
                pl.BlockSpec((tn_eff, tg_eff), lambda i, j: (i, j)),
            ],
            out_specs=pl.BlockSpec((1, 8, 128), lambda i, j: (i, 0, 0)),
            scratch_shapes=[pltpu.VMEM((tn_eff, 128), jnp.float32)],
        ),
        compiler_params=pltpu.CompilerParams(
            # cell axis parallel (megacore-splittable), gene axis is the
            # reduction carried in the (tn,128) scratch accumulator.
            dimension_semantics=("parallel", "arbitrary")),
    )(X, W, Y)

    # partials[i] holds per-(sublane,lane) partial sums of row tile i.
    return jnp.sum(partials)


def causal_linear_pca_forward(params, expr_mat, cc_mat, size_factor, batch_mat,
                              *, opt=1, tn=256, tg=2048,
                              expr_stream_dtype=jnp.bfloat16):
    lat = params["lat_coord"].astype(jnp.float32)
    cc = cc_mat.astype(jnp.float32)
    bat = batch_mat.astype(jnp.float32)

    N, G = expr_mat.shape
    C = cc.shape[1]

    log_sf = jnp.log(size_factor.reshape(N, 1).astype(jnp.float32))

    # ---- fused design matrix / weight stack (log_sf folded in; K padded to 8)
    X = jnp.concatenate(
        [lat, cc, bat, jnp.ones((N, 1), jnp.float32), log_sf], axis=1)
    W = jnp.concatenate(
        [params["W_expr"], params["C_expr"], params["B_expr"], params["bias_g"],
         jnp.ones((1, G), jnp.float32)], axis=0).astype(jnp.float32)
    K = X.shape[1]
    K_pad = _round_up(K, 8)
    if K_pad != K:
        X = jnp.concatenate([X, jnp.zeros((N, K_pad - K), jnp.float32)], axis=1)
        W = jnp.concatenate([W, jnp.zeros((K_pad - K, G), jnp.float32)], axis=0)

    # 16-bit expr stream.  bfloat16 represents integer counts exactly up to
    # 256; pass expr_stream_dtype=jnp.float32 for data with larger counts.
    Y = expr_mat.astype(expr_stream_dtype)

    # ---- hot O(N*G) Poisson NLL in Pallas ----
    expr_loss = _expr_poisson_nll(X, W, Y, tn=tn, tg=tg)

    # ---- tiny auxiliary regressions: plain XLA (negligible vs O(N*G)) ----
    pred_sf = lat @ params["w_sf"] + cc @ params["c_sf"] + bat @ params["b_sf"]
    size_factor_loss = jnp.sum((log_sf - pred_sf) ** 2) / N

    pred_cc = lat @ params["W_ccp"] + bat @ params["B_ccp"]
    cell_cycle_loss = jnp.sum((cc - pred_cc) ** 2) / (N * C)

    return expr_loss + opt * (-G * size_factor_loss - G * cell_cycle_loss)


def _reference_forward(params, expr_mat, cc_mat, size_factor, batch_mat, *, opt=1):
    lat = params["lat_coord"]
    N, G = expr_mat.shape
    C = cc_mat.shape[1]
    sf = size_factor.reshape(N, 1)
    log_sf = jnp.log(sf)

    eta = (lat @ params["W_expr"] + cc_mat @ params["C_expr"]
           + batch_mat @ params["B_expr"] + params["bias_g"])
    log_mu = eta + log_sf
    expr_loss = jnp.sum(jnp.exp(log_mu) - expr_mat * log_mu)

    pred_sf = lat @ params["w_sf"] + cc_mat @ params["c_sf"] + batch_mat @ params["b_sf"]
    size_factor_loss = jnp.sum((log_sf - pred_sf) ** 2) / N

    pred_cc = lat @ params["W_ccp"] + batch_mat @ params["B_ccp"]
    cell_cycle_loss = jnp.sum((cc_mat - pred_cc) ** 2) / (N * C)

    return expr_loss + opt * (-G * size_factor_loss - G * cell_cycle_loss)


def _make_test_case(key, N, G, D, C, B, lat_init_scale=1e-10):
    keys = jax.random.split(key, 16)
    expr_mat = jax.random.poisson(keys[0], 1.0, (N, G)).astype(jnp.float32)
    cc_mat = jax.random.normal(keys[1], (N, C), jnp.float32)
    size_factor = jnp.exp(0.1 * jax.random.normal(keys[2], (N,), jnp.float32))
    batch_idx = jax.random.randint(keys[3], (N,), 0, B)
    batch_mat = jax.nn.one_hot(batch_idx, B, dtype=jnp.float32)
    params = {
        "lat_coord": lat_init_scale * jax.random.normal(keys[4], (N, D), jnp.float32),
        "W_expr": 0.01 * jax.random.normal(keys[5], (D, G), jnp.float32),
        "C_expr": 0.01 * jax.random.normal(keys[6], (C, G), jnp.float32),
        "B_expr": 0.01 * jax.random.normal(keys[7], (B, G), jnp.float32),
        "bias_g": 0.01 * jax.random.normal(keys[8], (1, G), jnp.float32),
        "w_sf": 0.01 * jax.random.normal(keys[9], (D, 1), jnp.float32),
        "c_sf": 0.01 * jax.random.normal(keys[10], (C, 1), jnp.float32),
        "b_sf": 0.01 * jax.random.normal(keys[11], (B, 1), jnp.float32),
        "W_ccp": 0.01 * jax.random.normal(keys[12], (D, C), jnp.float32),
        "B_ccp": 0.01 * jax.random.normal(keys[13], (B, C), jnp.float32),
    }
    return params, expr_mat, cc_mat, size_factor, batch_mat


if __name__ == "__main__":
    key = jax.random.PRNGKey(0)
    k1, k2 = jax.random.split(key)

    # Case A: shapes deliberately NOT multiples of tile sizes -> edge masking.
    D, C, B = 8, 6, 3
    params, expr_mat, cc_mat, size_factor, batch_mat = _make_test_case(
        k1, N=200, G=272, D=D, C=C, B=B)
    ref = _reference_forward(params, expr_mat, cc_mat, size_factor, batch_mat, opt=1)

    # A1) default (large-tile) config -> single capped tile, edge-gated masks
    out_default = causal_linear_pca_forward(
        params, expr_mat, cc_mat, size_factor, batch_mat, opt=1)
    out_default = jax.block_until_ready(out_default)
    assert jnp.allclose(out_default, ref, rtol=1e-4, atol=1e-2), (out_default, ref)

    # A2) small tiles -> multi-step grid, interior (unmasked) + edge (masked)
    #     tiles, per-row-tile partial outputs
    out_tiled = causal_linear_pca_forward(
        params, expr_mat, cc_mat, size_factor, batch_mat, opt=1, tn=64, tg=128)
    out_tiled = jax.block_until_ready(out_tiled)
    assert jnp.allclose(out_tiled, ref, rtol=1e-4, atol=1e-2), (out_tiled, ref)

    # Case B: shapes that divide the tiles exactly -> pure unmasked kernel path.
    params2, expr2, cc2, sf2, bat2 = _make_test_case(
        k2, N=192, G=256, D=D, C=C, B=B)
    ref2 = _reference_forward(params2, expr2, cc2, sf2, bat2, opt=1)
    out2 = causal_linear_pca_forward(params2, expr2, cc2, sf2, bat2,
                                     opt=1, tn=64, tg=128)
    out2 = jax.block_until_ready(out2)
    assert jnp.allclose(out2, ref2, rtol=1e-4, atol=1e-2), (out2, ref2)

    print("KERNEL_OK")
</pallas_src>

<mosaic_0001>
module attributes {stable_mosaic.version = 11 : i64} {
  func.func @kernel(%arg0: i32, %arg1: i32, %arg2: memref<208x24xf32, #tpu.memory_space<vmem>>, %arg3: memref<24x384xf32, #tpu.memory_space<vmem>>, %arg4: memref<208x384xbf16, #tpu.memory_space<vmem>>, %arg5: memref<1x8x128xf32, #tpu.memory_space<vmem>>, %arg6: memref<208x128xf32, #tpu.memory_space<vmem>>) attributes {dimension_semantics = [#tpu.dimension_semantics<parallel>, #tpu.dimension_semantics<arbitrary>], iteration_bounds = array<i64: 1, 1>, scalar_prefetch = 0 : i64, scratch_operands = 1 : i64, tpu.core_type = #tpu.core_type<tc>, window_params = [{transform_indices = @transform_0, window_bounds = array<i64: 208, 24>}, {pipeline_mode = #tpu.pipeline_mode<synchronous>, transform_indices = @transform_1, window_bounds = array<i64: 24, 384>}, {transform_indices = @transform_2, window_bounds = array<i64: 208, 384>}, {transform_indices = @transform_3, window_bounds = array<i64: 1, 8, 128>}]} {
    %c0_i32 = arith.constant 0 : i32
    %0 = arith.cmpi eq, %arg1, %c0_i32 : i32
    %1 = arith.extui %0 : i1 to i32
    %c0_i32_0 = arith.constant 0 : i32
    %2 = arith.cmpi ne, %1, %c0_i32_0 : i32
    scf.if %2 {
      %cst_11 = arith.constant 0.000000e+00 : f32
      %25 = vector.broadcast %cst_11 : f32 to vector<208x128xf32>
      %c0_12 = arith.constant 0 : index
      %c0_13 = arith.constant 0 : index
      %26 = vector.load %arg6[%c0_12, %c0_13] : memref<208x128xf32, #tpu.memory_space<vmem>>, vector<208x128xf32>
      tpu.vector_store %arg6[%c0_12, %c0_13], %25 {strides = array<i32>} : memref<208x128xf32, #tpu.memory_space<vmem>>, vector<208x128xf32>,
    } else {
    }
    %c384_i32 = arith.constant 384 : i32
    %3 = arith.muli %arg1, %c384_i32 : i32
    %4 = tpu.assume_multiple %3, 128 : i32
    %c0 = arith.constant 0 : index
    %5 = arith.index_cast %4 : i32 to index
    %6 = vector.load %arg3[%c0, %5] : memref<24x384xf32, #tpu.memory_space<vmem>>, vector<24x384xf32>
    %c0_1 = arith.constant 0 : index
    %c0_2 = arith.constant 0 : index
    %7 = vector.load %arg2[%c0_1, %c0_2] : memref<208x24xf32, #tpu.memory_space<vmem>>, vector<208x24xf32>
    %cst = arith.constant dense<0.000000e+00> : vector<208x384xf32>
    %8 = tpu.matmul %7, %6, %cst {dimension_numbers = #tpu.dot_dimension_numbers<[1], [0], [0], [1], [0, 0, 1, 1], [], []>} : vector<208x24xf32>, vector<24x384xf32>, vector<208x384xf32> -> vector<208x384xf32>
    %c0_3 = arith.constant 0 : index
    %c0_4 = arith.constant 0 : index
    %9 = vector.load %arg4[%c0_3, %c0_4] : memref<208x384xbf16, #tpu.memory_space<vmem>>, vector<208x384xbf16>
    %10 = arith.extf %9 : vector<208x384xbf16> to vector<208x384xf32>
    %11 = math.exp %8 : vector<208x384xf32>
    %12 = arith.mulf %10, %8 : vector<208x384xf32>
    %13 = arith.subf %11, %12 : vector<208x384xf32>
    %c0_i32_5 = arith.constant 0 : i32
    %14 = arith.cmpi eq, %arg0, %c0_i32_5 : i32
    %c0_i32_6 = arith.constant 0 : i32
    %15 = arith.cmpi eq, %arg1, %c0_i32_6 : i32
    %16 = arith.ori %14, %15 : i1
    %17 = arith.extui %16 : i1 to i32
    %c0_i32_7 = arith.constant 0 : i32
    %18 = arith.cmpi ne, %17, %c0_i32_7 : i32
    scf.if %18 {
      %25 = tpu.iota {dimensions = array<i32: 0>} : vector<208x384xi32>
      %c208_i32 = arith.constant 208 : i32
      %26 = arith.muli %arg0, %c208_i32 : i32
      %27 = vector.broadcast %26 : i32 to vector<208x384xi32>
      %28 = arith.addi %25, %27 : vector<208x384xi32>
      %c200_i32 = arith.constant 200 : i32
      %29 = vector.broadcast %c200_i32 : i32 to vector<208x384xi32>
      %30 = arith.cmpi slt, %28, %29 : vector<208x384xi32>
      %31 = tpu.iota {dimensions = array<i32: 1>} : vector<208x384xi32>
      %c384_i32_11 = arith.constant 384 : i32
      %32 = arith.muli %arg1, %c384_i32_11 : i32
      %33 = vector.broadcast %32 : i32 to vector<208x384xi32>
      %34 = arith.addi %31, %33 : vector<208x384xi32>
      %c272_i32 = arith.constant 272 : i32
      %35 = vector.broadcast %c272_i32 : i32 to vector<208x384xi32>
      %36 = arith.cmpi slt, %34, %35 : vector<208x384xi32>
      %37 = arith.andi %30, %36 : vector<208x384xi1>
      %c0_12 = arith.constant 0 : index
      %c0_13 = arith.constant 0 : index
      %38 = vector.load %arg6[%c0_12, %c0_13] : memref<208x128xf32, #tpu.memory_space<vmem>>, vector<208x128xf32>
      %cst_14 = arith.constant 0.000000e+00 : f32
      %39 = vector.broadcast %cst_14 : f32 to vector<208x384xf32>
      %40 = arith.select %37, %13, %39 : vector<208x384xi1>, vector<208x384xf32>
      %41 = vector.extract_strided_slice %40 {offsets = [0, 0], sizes = [208, 128], strides = [1, 1]} : vector<208x384xf32> to vector<208x128xf32>
      %42 = vector.extract_strided_slice %40 {offsets = [0, 128], sizes = [208, 128], strides = [1, 1]} : vector<208x384xf32> to vector<208x128xf32>
      %43 = arith.addf %41, %42 : vector<208x128xf32>
      %44 = vector.extract_strided_slice %40 {offsets = [0, 256], sizes = [208, 128], strides = [1, 1]} : vector<208x384xf32> to vector<208x128xf32>
      %45 = arith.addf %43, %44 : vector<208x128xf32>
      %46 = arith.addf %38, %45 : vector<208x128xf32>
      %c0_15 = arith.constant 0 : index
      %c0_16 = arith.constant 0 : index
      %47 = vector.load %arg6[%c0_15, %c0_16] : memref<208x128xf32, #tpu.memory_space<vmem>>, vector<208x128xf32>
      tpu.vector_store %arg6[%c0_15, %c0_16], %46 {strides = array<i32>} : memref<208x128xf32, #tpu.memory_space<vmem>>, vector<208x128xf32>,
    } else {
    }
    %true = arith.constant true
    %19 = arith.xori %16, %true : i1
    %20 = arith.extui %19 : i1 to i32
    %c0_i32_8 = arith.constant 0 : i32
    %21 = arith.cmpi ne, %20, %c0_i32_8 : i32
    scf.if %21 {
      %c0_11 = arith.constant 0 : index
      %c0_12 = arith.constant 0 : index
      %25 = vector.load %arg6[%c0_11, %c0_12] : memref<208x128xf32, #tpu.memory_space<vmem>>, vector<208x128xf32>
      %26 = vector.extract_strided_slice %13 {offsets = [0, 0], sizes = [208, 128], strides = [1, 1]} : vector<208x384xf32> to vector<208x128xf32>
      %27 = vector.extract_strided_slice %13 {offsets = [0, 128], sizes = [208, 128], strides = [1, 1]} : vector<208x384xf32> to vector<208x128xf32>
      %28 = arith.addf %26, %27 : vector<208x128xf32>
      %29 = vector.extract_strided_slice %13 {offsets = [0, 256], sizes = [208, 128], strides = [1, 1]} : vector<208x384xf32> to vector<208x128xf32>
      %30 = arith.addf %28, %29 : vector<208x128xf32>
      %31 = arith.addf %25, %30 : vector<208x128xf32>
      %c0_13 = arith.constant 0 : index
      %c0_14 = arith.constant 0 : index
      %32 = vector.load %arg6[%c0_13, %c0_14] : memref<208x128xf32, #tpu.memory_space<vmem>>, vector<208x128xf32>
      tpu.vector_store %arg6[%c0_13, %c0_14], %31 {strides = array<i32>} : memref<208x128xf32, #tpu.memory_space<vmem>>, vector<208x128xf32>,
    } else {
    }
    %c0_i32_9 = arith.constant 0 : i32
    %22 = arith.cmpi eq, %arg1, %c0_i32_9 : i32
    %23 = arith.extui %22 : i1 to i32
    %c0_i32_10 = arith.constant 0 : i32
    %24 = arith.cmpi ne, %23, %c0_i32_10 : i32
    scf.if %24 {
      %c0_11 = arith.constant 0 : index
      %c0_12 = arith.constant 0 : index
      %25 = vector.load %arg6[%c0_11, %c0_12] : memref<208x128xf32, #tpu.memory_space<vmem>>, vector<208x128xf32>
      %26 = vector.extract_strided_slice %25 {offsets = [0, 0], sizes = [8, 128], strides = [1, 1]} : vector<208x128xf32> to vector<8x128xf32>
      %27 = vector.extract_strided_slice %25 {offsets = [8, 0], sizes = [8, 128], strides = [1, 1]} : vector<208x128xf32> to vector<8x128xf32>
      %28 = arith.addf %26, %27 : vector<8x128xf32>
      %29 = vector.extract_strided_slice %25 {offsets = [16, 0], sizes = [8, 128], strides = [1, 1]} : vector<208x128xf32> to vector<8x128xf32>
      %30 = arith.addf %28, %29 : vector<8x128xf32>
      %31 = vector.extract_strided_slice %25 {offsets = [24, 0], sizes = [8, 128], strides = [1, 1]} : vector<208x128xf32> to vector<8x128xf32>
      %32 = arith.addf %30, %31 : vector<8x128xf32>
      %33 = vector.extract_strided_slice %25 {offsets = [32, 0], sizes = [8, 128], strides = [1, 1]} : vector<208x128xf32> to vector<8x128xf32>
      %34 = arith.addf %32, %33 : vector<8x128xf32>
      %35 = vector.extract_strided_slice %25 {offsets = [40, 0], sizes = [8, 128], strides = [1, 1]} : vector<208x128xf32> to vector<8x128xf32>
      %36 = arith.addf %34, %35 : vector<8x128xf32>
      %37 = vector.extract_strided_slice %25 {offsets = [48, 0], sizes = [8, 128], strides = [1, 1]} : vector<208x128xf32> to vector<8x128xf32>
      %38 = arith.addf %36, %37 : vector<8x128xf32>
      %39 = vector.extract_strided_slice %25 {offsets = [56, 0], sizes = [8, 128], strides = [1, 1]} : vector<208x128xf32> to vector<8x128xf32>
      %40 = arith.addf %38, %39 : vector<8x128xf32>
      %41 = vector.extract_strided_slice %25 {offsets = [64, 0], sizes = [8, 128], strides = [1, 1]} : vector<208x128xf32> to vector<8x128xf32>
      %42 = arith.addf %40, %41 : vector<8x128xf32>
      %43 = vector.extract_strided_slice %25 {offsets = [72, 0], sizes = [8, 128], strides = [1, 1]} : vector<208x128xf32> to vector<8x128xf32>
      %44 = arith.addf %42, %43 : vector<8x128xf32>
      %45 = vector.extract_strided_slice %25 {offsets = [80, 0], sizes = [8, 128], strides = [1, 1]} : vector<208x128xf32> to vector<8x128xf32>
      %46 = arith.addf %44, %45 : vector<8x128xf32>
      %47 = vector.extract_strided_slice %25 {offsets = [88, 0], sizes = [8, 128], strides = [1, 1]} : vector<208x128xf32> to vector<8x128xf32>
      %48 = arith.addf %46, %47 : vector<8x128xf32>
      %49 = vector.extract_strided_slice %25 {offsets = [96, 0], sizes = [8, 128], strides = [1, 1]} : vector<208x128xf32> to vector<8x128xf32>
      %50 = arith.addf %48, %49 : vector<8x128xf32>
      %51 = vector.extract_strided_slice %25 {offsets = [104, 0], sizes = [8, 128], strides = [1, 1]} : vector<208x128xf32> to vector<8x128xf32>
      %52 = arith.addf %50, %51 : vector<8x128xf32>
      %53 = vector.extract_strided_slice %25 {offsets = [112, 0], sizes = [8, 128], strides = [1, 1]} : vector<208x128xf32> to vector<8x128xf32>
      %54 = arith.addf %52, %53 : vector<8x128xf32>
      %55 = vector.extract_strided_slice %25 {offsets = [120, 0], sizes = [8, 128], strides = [1, 1]} : vector<208x128xf32> to vector<8x128xf32>
      %56 = arith.addf %54, %55 : vector<8x128xf32>
      %57 = vector.extract_strided_slice %25 {offsets = [128, 0], sizes = [8, 128], strides = [1, 1]} : vector<208x128xf32> to vector<8x128xf32>
      %58 = arith.addf %56, %57 : vector<8x128xf32>
      %59 = vector.extract_strided_slice %25 {offsets = [136, 0], sizes = [8, 128], strides = [1, 1]} : vector<208x128xf32> to vector<8x128xf32>
      %60 = arith.addf %58, %59 : vector<8x128xf32>
      %61 = vector.extract_strided_slice %25 {offsets = [144, 0], sizes = [8, 128], strides = [1, 1]} : vector<208x128xf32> to vector<8x128xf32>
      %62 = arith.addf %60, %61 : vector<8x128xf32>
      %63 = vector.extract_strided_slice %25 {offsets = [152, 0], sizes = [8, 128], strides = [1, 1]} : vector<208x128xf32> to vector<8x128xf32>
      %64 = arith.addf %62, %63 : vector<8x128xf32>
      %65 = vector.extract_strided_slice %25 {offsets = [160, 0], sizes = [8, 128], strides = [1, 1]} : vector<208x128xf32> to vector<8x128xf32>
      %66 = arith.addf %64, %65 : vector<8x128xf32>
      %67 = vector.extract_strided_slice %25 {offsets = [168, 0], sizes = [8, 128], strides = [1, 1]} : vector<208x128xf32> to vector<8x128xf32>
      %68 = arith.addf %66, %67 : vector<8x128xf32>
      %69 = vector.extract_strided_slice %25 {offsets = [176, 0], sizes = [8, 128], strides = [1, 1]} : vector<208x128xf32> to vector<8x128xf32>
      %70 = arith.addf %68, %69 : vector<8x128xf32>
      %71 = vector.extract_strided_slice %25 {offsets = [184, 0], sizes = [8, 128], strides = [1, 1]} : vector<208x128xf32> to vector<8x128xf32>
      %72 = arith.addf %70, %71 : vector<8x128xf32>
      %73 = vector.extract_strided_slice %25 {offsets = [192, 0], sizes = [8, 128], strides = [1, 1]} : vector<208x128xf32> to vector<8x128xf32>
      %74 = arith.addf %72, %73 : vector<8x128xf32>
      %75 = vector.extract_strided_slice %25 {offsets = [200, 0], sizes = [8, 128], strides = [1, 1]} : vector<208x128xf32> to vector<8x128xf32>
      %76 = arith.addf %74, %75 : vector<8x128xf32>
      %77 = vector.shape_cast %76 : vector<8x128xf32> to vector<1x8x128xf32>
      %c0_13 = arith.constant 0 : index
      %c0_14 = arith.constant 0 : index
      %c0_15 = arith.constant 0 : index
      %78 = vector.load %arg5[%c0_13, %c0_14, %c0_15] : memref<1x8x128xf32, #tpu.memory_space<vmem>>, vector<1x8x128xf32>
      tpu.vector_store %arg5[%c0_13, %c0_14, %c0_15], %77 {strides = array<i32>} : memref<1x8x128xf32, #tpu.memory_space<vmem>>, vector<1x8x128xf32>,
    } else {
    }
    return
  }
  func.func @transform_0(%arg0: i32, %arg1: i32) -> (i32, i32) {
    %c0_i32 = arith.constant 0 : i32
    %c0_i32_0 = arith.constant 0 : i32
    return %arg0, %c0_i32 : i32, i32
  }
  func.func @transform_1(%arg0: i32, %arg1: i32) -> (i32, i32) {
    %c0_i32 = arith.constant 0 : i32
    %c0_i32_0 = arith.constant 0 : i32
    %c0_i32_1 = arith.constant 0 : i32
    return %c0_i32, %c0_i32_0 : i32, i32
  }
  func.func @transform_2(%arg0: i32, %arg1: i32) -> (i32, i32) {
    %c0_i32 = arith.constant 0 : i32
    return %arg0, %arg1 : i32, i32
  }
  func.func @transform_3(%arg0: i32, %arg1: i32) -> (i32, i32, i32) {
    %c0_i32 = arith.constant 0 : i32
    %c0_i32_0 = arith.constant 0 : i32
    %c0_i32_1 = arith.constant 0 : i32
    return %arg0, %c0_i32, %c0_i32_0 : i32, i32, i32
  }
}

</mosaic_0001>

<llo_original>
// kernel: tpu_custom_call.1
$region0: #{tpu_custom_call.1}
  #allocation0 [shape = 'u32[]', space=smem, size = 0x4, offset = 0x4, fixed_abs, tag = 'smem constant byte address 0x4 - core index']
  #allocation1 [shape = 'u32[72,128]{1,0:T(1,128)}', space=vmem, size = 0x9000, scoped, tag = 'internal scratch']
  #allocation2 [shape = 'f32[208,128]{1,0:T(8,128)}', space=vmem, size = 0x1a000, scoped, tag = 'scratch operand']
  %s0 = inlined_call_operand.vmem [shape: f32[200,24], index: 0, kind: input, shape index: {}]
  %s1 = inlined_call_operand.vmem [shape: f32[24,384], index: 1, kind: input, shape index: {}]
  %s2 = inlined_call_operand.vmem [shape: bf16[200,272], index: 2, kind: input, shape index: {}]
  %s3 = inlined_call_operand.hbm [shape: f32[1,8,128], index: 3, kind: output, shape index: {}]
  %s4 = sld [smem:[#allocation0]]
  $region38: #{tpu_custom_call.1} parent=0
    _
  %s6 = ssub.s32 1, %s4
  %s7 = scalar_select 0, %s6, %s4
  $region1: #{tpu_custom_call.1} parent=0
    #allocation3 [shape = 'u8[4096]{0}', space=vmem, size = 0x1000, scoped, tag = 'output window, operand 0, single buffered']
    #allocation4 [shape = 's32[1]{0}', space=sflag, size = 0x4, scoped, tag = 'scoped memory for tpu_custom_call.1']
    %8 = vsyncpa [#allocation4], 0
    // Predicated region
    $region2: #{tpu_custom_call.1} parent=1 // pred_check
      _
    $region3: #{tpu_custom_call.1} parent=1 // pred_check_branch
      %10 = sbr.rel (0) target = $region5
    $region4: #{tpu_custom_call.1} parent=1 // pred_region
      _
    $region5: #{tpu_custom_call.1} parent=1 // pred_fallthru
      _
    // Predicated region
    $region6: #{tpu_custom_call.1} parent=1 // pred_check
      _
    $region7: #{tpu_custom_call.1} parent=1 // pred_check_branch
      %12 = sbr.rel (0) target = $region9
    $region8: #{tpu_custom_call.1} parent=1 // pred_region
      _
    $region9: #{tpu_custom_call.1} parent=1 // pred_fallthru
      _
    // Predicated region
    $region10: #{tpu_custom_call.1} parent=1 // pred_check
      _
    $region11: #{tpu_custom_call.1} parent=1 // pred_check_branch
      %14 = sbr.rel (0) target = $region13
    $region12: #{tpu_custom_call.1} parent=1 // pred_region
      _
    $region13: #{tpu_custom_call.1} parent=1 // pred_fallthru
      _
    %p15 = scmp.eq.s32.totalorder 0, 0
    // Predicated region
    $region14: #{tpu_custom_call.1} parent=1 // pred_check
      %p16 = pneg %p15
    $region15: #{tpu_custom_call.1} parent=1 // pred_check_branch
      %18 = sbr.rel (%p16) target = $region17
    $region16: #{tpu_custom_call.1} parent=1 // pred_region
      %19 = vst [vmem:[#allocation2] sm:$0xff] 0.0
      %20 = vst [vmem:[#allocation2 + $0x8] sm:$0xff] 0.0
      %21 = vst [vmem:[#allocation2 + $0x10] sm:$0xff] 0.0
      %22 = vst [vmem:[#allocation2 + $0x18] sm:$0xff] 0.0
      %23 = vst [vmem:[#allocation2 + $0x20] sm:$0xff] 0.0
      %24 = vst [vmem:[#allocation2 + $0x28] sm:$0xff] 0.0
      %25 = vst [vmem:[#allocation2 + $0x30] sm:$0xff] 0.0
      %26 = vst [vmem:[#allocation2 + $0x38] sm:$0xff] 0.0
      %27 = vst [vmem:[#allocation2 + $0x40] sm:$0xff] 0.0
      %28 = vst [vmem:[#allocation2 + $0x48] sm:$0xff] 0.0
      %29 = vst [vmem:[#allocation2 + $0x50] sm:$0xff] 0.0
      %30 = vst [vmem:[#allocation2 + $0x58] sm:$0xff] 0.0
      %31 = vst [vmem:[#allocation2 + $0x60] sm:$0xff] 0.0
      %32 = vst [vmem:[#allocation2 + $0x68] sm:$0xff] 0.0
      %33 = vst [vmem:[#allocation2 + $0x70] sm:$0xff] 0.0
      %34 = vst [vmem:[#allocation2 + $0x78] sm:$0xff] 0.0
      %35 = vst [vmem:[#allocation2 + $0x80] sm:$0xff] 0.0
      %36 = vst [vmem:[#allocation2 + $0x88] sm:$0xff] 0.0
      %37 = vst [vmem:[#allocation2 + $0x90] sm:$0xff] 0.0
      %38 = vst [vmem:[#allocation2 + $0x98] sm:$0xff] 0.0
      %39 = vst [vmem:[#allocation2 + $0xa0] sm:$0xff] 0.0
      %40 = vst [vmem:[#allocation2 + $0xa8] sm:$0xff] 0.0
      %41 = vst [vmem:[#allocation2 + $0xb0] sm:$0xff] 0.0
      %42 = vst [vmem:[#allocation2 + $0xb8] sm:$0xff] 0.0
      %43 = vst [vmem:[#allocation2 + $0xc0] sm:$0xff] 0.0
      %44 = vst [vmem:[#allocation2 + $0xc8] sm:$0xff] 0.0
    $region17: #{tpu_custom_call.1} parent=1 // pred_fallthru
      _
    %s45 = smul.u32 0, 384
    %s46 = sshra.s32 %s45, 7
    %s47 = sand.u32 %s45, 127
    %s48 = smul.addr %s46, 8
    %s49 = scalar_lea.vmem %s1, %s48
    %v50 = vld [vmem:[%s49] sm:$0xff]
    %v51 = vld [vmem:[%s49 + $0x8] sm:$0xff]
    %v52 = vld [vmem:[%s49 + $0x10] sm:$0xff]
    %v53 = vld [vmem:[%s49 + $0x18] sm:$0xff]
    %v54 = vld [vmem:[%s49 + $0x20] sm:$0xff]
    %v55 = vld [vmem:[%s49 + $0x28] sm:$0xff]
    %v56 = vld [vmem:[%s49 + $0x30] sm:$0xff]
    %v57 = vld [vmem:[%s49 + $0x38] sm:$0xff]
    %v58 = vld [vmem:[%s49 + $0x40] sm:$0xff]
    %v59 = vld [vmem:[%s0] sm:$0xff]
    %v60 = vld [vmem:[%s0 + $0x8] sm:$0xff]
    %v61 = vld [vmem:[%s0 + $0x10] sm:$0xff]
    %v62 = vld [vmem:[%s0 + $0x18] sm:$0xff]
    %v63 = vld [vmem:[%s0 + $0x20] sm:$0xff]
    %v64 = vld [vmem:[%s0 + $0x28] sm:$0xff]
    %v65 = vld [vmem:[%s0 + $0x30] sm:$0xff]
    %v66 = vld [vmem:[%s0 + $0x38] sm:$0xff]
    %v67 = vld [vmem:[%s0 + $0x40] sm:$0xff]
    %v68 = vld [vmem:[%s0 + $0x48] sm:$0xff]
    %v69 = vld [vmem:[%s0 + $0x50] sm:$0xff]
    %v70 = vld [vmem:[%s0 + $0x58] sm:$0xff]
    %v71 = vld [vmem:[%s0 + $0x60] sm:$0xff]
    %v72 = vld [vmem:[%s0 + $0x68] sm:$0xff]
    %v73 = vld [vmem:[%s0 + $0x70] sm:$0xff]
    %v74 = vld [vmem:[%s0 + $0x78] sm:$0xff]
    %v75 = vld [vmem:[%s0 + $0x80] sm:$0xff]
    %v76 = vld [vmem:[%s0 + $0x88] sm:$0xff]
    %v77 = vld [vmem:[%s0 + $0x90] sm:$0xff]
    %v78 = vld [vmem:[%s0 + $0x98] sm:$0xff]
    %v79 = vld [vmem:[%s0 + $0xa0] sm:$0xff]
    %v80 = vld [vmem:[%s0 + $0xa8] sm:$0xff]
    %v81 = vld [vmem:[%s0 + $0xb0] sm:$0xff]
    %v82 = vld [vmem:[%s0 + $0xb8] sm:$0xff]
    %v83 = vld [vmem:[%s0 + $0xc0] sm:$0xff]
    %v84 = vld [vmem:[%s0 + $0xc8] sm:$0xff]
    %vm85 = vcmask 195584
    %v87 = vsel %vm85, %v59, 0
    %v90 = vsel %vm85, %v60, 0
    %v93 = vsel %vm85, %v61, 0
    %v96 = vsel %vm85, %v62, 0
    %v99 = vsel %vm85, %v63, 0
    %v102 = vsel %vm85, %v64, 0
    %v105 = vsel %vm85, %v65, 0
    %v108 = vsel %vm85, %v66, 0
    %v111 = vsel %vm85, %v67, 0
    %v114 = vsel %vm85, %v68, 0
    %v117 = vsel %vm85, %v69, 0
    %v120 = vsel %vm85, %v70, 0
    %v123 = vsel %vm85, %v71, 0
    %v126 = vsel %vm85, %v72, 0
    %v129 = vsel %vm85, %v73, 0
    %v132 = vsel %vm85, %v74, 0
    %v135 = vsel %vm85, %v75, 0
    %v138 = vsel %vm85, %v76, 0
    %v141 = vsel %vm85, %v77, 0
    %v144 = vsel %vm85, %v78, 0
    %v147 = vsel %vm85, %v79, 0
    %v150 = vsel %vm85, %v80, 0
    %v153 = vsel %vm85, %v81, 0
    %v156 = vsel %vm85, %v82, 0
    %v159 = vsel %vm85, %v83, 0
    %v162 = vsel %vm85, %v84, 0
    %164 = vmatpush.msra.mxu0 0.0
    %165 = vmatpush.msra.mxu0 0.0
    %166 = vmatpush.msra.mxu0 0.0
    %167 = vmatpush.msra.mxu0 0.0
    %168 = vmatpush.msra.mxu0 0.0
    %169 = vmatpush.msra.mxu0 0.0
    %170 = vmatpush.msra.mxu0 0.0
    %171 = vmatpush.msra.mxu0 0.0
    %172 = vmatpush.msra.mxu0 0.0
    %173 = vmatpush.msra.mxu0 0.0
    %174 = vmatpush.msra.mxu0 0.0
    %175 = vmatpush.msra.mxu0 0.0
    %176 = vmatpush.msra.mxu0 0.0
    %177 = vmatpush.msra.mxu0 %v56
    %178 = vmatpush.msra.mxu0 %v53
    %179 = vmatpush.msra.mxu0 %v50
    %180 = vmatmul.f32.gmra.mxu0 %v87
    %v181 = vpop.f32.mrf.mxu0
    %v182 = vadd.f32 0.0, %v181
    %183 = vmatmul.f32.gmra.mxu0 %v90
    %v184 = vpop.f32.mrf.mxu0
    %v185 = vadd.f32 0.0, %v184
    %186 = vmatmul.f32.gmra.mxu0 %v93
    %v187 = vpop.f32.mrf.mxu0
    %v188 = vadd.f32 0.0, %v187
    %189 = vmatmul.f32.gmra.mxu0 %v96
    %v190 = vpop.f32.mrf.mxu0
    %v191 = vadd.f32 0.0, %v190
    %192 = vmatmul.f32.gmra.mxu0 %v99
    %v193 = vpop.f32.mrf.mxu0
    %v194 = vadd.f32 0.0, %v193
    %195 = vmatmul.f32.gmra.mxu0 %v102
    %v196 = vpop.f32.mrf.mxu0
    %v197 = vadd.f32 0.0, %v196
    %198 = vmatmul.f32.gmra.mxu0 %v105
    %v199 = vpop.f32.mrf.mxu0
    %v200 = vadd.f32 0.0, %v199
    %201 = vmatmul.f32.gmra.mxu0 %v108
    %v202 = vpop.f32.mrf.mxu0
    %v203 = vadd.f32 0.0, %v202
    %204 = vmatmul.f32.gmra.mxu0 %v111
    %v205 = vpop.f32.mrf.mxu0
    %v206 = vadd.f32 0.0, %v205
    %207 = vmatmul.f32.gmra.mxu0 %v114
    %v208 = vpop.f32.mrf.mxu0
    %v209 = vadd.f32 0.0, %v208
    %210 = vmatmul.f32.gmra.mxu0 %v117
    %v211 = vpop.f32.mrf.mxu0
    %v212 = vadd.f32 0.0, %v211
    %213 = vmatmul.f32.gmra.mxu0 %v120
    %v214 = vpop.f32.mrf.mxu0
    %v215 = vadd.f32 0.0, %v214
    %216 = vmatmul.f32.gmra.mxu0 %v123
    %v217 = vpop.f32.mrf.mxu0
    %v218 = vadd.f32 0.0, %v217
    %219 = vmatmul.f32.gmra.mxu0 %v126
    %v220 = vpop.f32.mrf.mxu0
    %v221 = vadd.f32 0.0, %v220
    %222 = vmatmul.f32.gmra.mxu0 %v129
    %v223 = vpop.f32.mrf.mxu0
    %v224 = vadd.f32 0.0, %v223
    %225 = vmatmul.f32.gmra.mxu0 %v132
    %v226 = vpop.f32.mrf.mxu0
    %v227 = vadd.f32 0.0, %v226
    %228 = vmatmul.f32.gmra.mxu0 %v135
    %v229 = vpop.f32.mrf.mxu0
    %v230 = vadd.f32 0.0, %v229
    %231 = vmatmul.f32.gmra.mxu0 %v138
    %v232 = vpop.f32.mrf.mxu0
    %v233 = vadd.f32 0.0, %v232
    %234 = vmatmul.f32.gmra.mxu0 %v141
    %v235 = vpop.f32.mrf.mxu0
    %v236 = vadd.f32 0.0, %v235
    %237 = vmatmul.f32.gmra.mxu0 %v144
    %v238 = vpop.f32.mrf.mxu0
    %v239 = vadd.f32 0.0, %v238
    %240 = vmatmul.f32.gmra.mxu0 %v147
    %v241 = vpop.f32.mrf.mxu0
    %v242 = vadd.f32 0.0, %v241
    %243 = vmatmul.f32.gmra.mxu0 %v150
    %v244 = vpop.f32.mrf.mxu0
    %v245 = vadd.f32 0.0, %v244
    %246 = vmatmul.f32.gmra.mxu0 %v153
    %v247 = vpop.f32.mrf.mxu0
    %v248 = vadd.f32 0.0, %v247
    %249 = vmatmul.f32.gmra.mxu0 %v156
    %v250 = vpop.f32.mrf.mxu0
    %v251 = vadd.f32 0.0, %v250
    %252 = vmatmul.f32.gmra.mxu0 %v159
    %v253 = vpop.f32.mrf.mxu0
    %v254 = vadd.f32 0.0, %v253
    %255 = vmatmul.f32.gmra.mxu0 %v162
    %v256 = vpop.f32.mrf.mxu0
    %v257 = vadd.f32 0.0, %v256
    %258 = vdwg.mxu0
    %259 = vmatpush.msra.mxu0 0.0
    %260 = vmatpush.msra.mxu0 0.0
    %261 = vmatpush.msra.mxu0 0.0
    %262 = vmatpush.msra.mxu0 0.0
    %263 = vmatpush.msra.mxu0 0.0
    %264 = vmatpush.msra.mxu0 0.0
    %265 = vmatpush.msra.mxu0 0.0
    %266 = vmatpush.msra.mxu0 0.0
    %267 = vmatpush.msra.mxu0 0.0
    %268 = vmatpush.msra.mxu0 0.0
    %269 = vmatpush.msra.mxu0 0.0
    %270 = vmatpush.msra.mxu0 0.0
    %271 = vmatpush.msra.mxu0 0.0
    %272 = vmatpush.msra.mxu0 %v57
    %273 = vmatpush.msra.mxu0 %v54
    %274 = vmatpush.msra.mxu0 %v51
    %275 = vmatmul.f32.gmra.mxu0 %v87
    %v276 = vpop.f32.mrf.mxu0
    %v277 = vadd.f32 0.0, %v276
    %278 = vmatmul.f32.gmra.mxu0 %v90
    %v279 = vpop.f32.mrf.mxu0
    %v280 = vadd.f32 0.0, %v279
    %281 = vmatmul.f32.gmra.mxu0 %v93
    %v282 = vpop.f32.mrf.mxu0
    %v283 = vadd.f32 0.0, %v282
    %284 = vmatmul.f32.gmra.mxu0 %v96
    %v285 = vpop.f32.mrf.mxu0
    %v286 = vadd.f32 0.0, %v285
    %287 = vmatmul.f32.gmra.mxu0 %v99
    %v288 = vpop.f32.mrf.mxu0
    %v289 = vadd.f32 0.0, %v288
    %290 = vmatmul.f32.gmra.mxu0 %v102
    %v291 = vpop.f32.mrf.mxu0
    %v292 = vadd.f32 0.0, %v291
    %293 = vmatmul.f32.gmra.mxu0 %v105
    %v294 = vpop.f32.mrf.mxu0
    %v295 = vadd.f32 0.0, %v294
    %296 = vmatmul.f32.gmra.mxu0 %v108
    %v297 = vpop.f32.mrf.mxu0
    %v298 = vadd.f32 0.0, %v297
    %299 = vmatmul.f32.gmra.mxu0 %v111
    %v300 = vpop.f32.mrf.mxu0
    %v301 = vadd.f32 0.0, %v300
    %302 = vmatmul.f32.gmra.mxu0 %v114
    %v303 = vpop.f32.mrf.mxu0
    %v304 = vadd.f32 0.0, %v303
    %305 = vmatmul.f32.gmra.mxu0 %v117
    %v306 = vpop.f32.mrf.mxu0
    %v307 = vadd.f32 0.0, %v306
    %308 = vmatmul.f32.gmra.mxu0 %v120
    %v309 = vpop.f32.mrf.mxu0
    %v310 = vadd.f32 0.0, %v309
    %311 = vmatmul.f32.gmra.mxu0 %v123
    %v312 = vpop.f32.mrf.mxu0
    %v313 = vadd.f32 0.0, %v312
    %314 = vmatmul.f32.gmra.mxu0 %v126
    %v315 = vpop.f32.mrf.mxu0
    %v316 = vadd.f32 0.0, %v315
    %317 = vmatmul.f32.gmra.mxu0 %v129
    %v318 = vpop.f32.mrf.mxu0
    %v319 = vadd.f32 0.0, %v318
    %320 = vmatmul.f32.gmra.mxu0 %v132
    %v321 = vpop.f32.mrf.mxu0
    %v322 = vadd.f32 0.0, %v321
    %323 = vmatmul.f32.gmra.mxu0 %v135
    %v324 = vpop.f32.mrf.mxu0
    %v325 = vadd.f32 0.0, %v324
    %326 = vmatmul.f32.gmra.mxu0 %v138
    %v327 = vpop.f32.mrf.mxu0
    %v328 = vadd.f32 0.0, %v327
    %329 = vmatmul.f32.gmra.mxu0 %v141
    %v330 = vpop.f32.mrf.mxu0
    %v331 = vadd.f32 0.0, %v330
    %332 = vmatmul.f32.gmra.mxu0 %v144
    %v333 = vpop.f32.mrf.mxu0
    %v334 = vadd.f32 0.0, %v333
    %335 = vmatmul.f32.gmra.mxu0 %v147
    %v336 = vpop.f32.mrf.mxu0
    %v337 = vadd.f32 0.0, %v336
    %338 = vmatmul.f32.gmra.mxu0 %v150
    %v339 = vpop.f32.mrf.mxu0
    %v340 = vadd.f32 0.0, %v339
    %341 = vmatmul.f32.gmra.mxu0 %v153
    %v342 = vpop.f32.mrf.mxu0
    %v343 = vadd.f32 0.0, %v342
    %344 = vmatmul.f32.gmra.mxu0 %v156
    %v345 = vpop.f32.mrf.mxu0
    %v346 = vadd.f32 0.0, %v345
    %347 = vmatmul.f32.gmra.mxu0 %v159
    %v348 = vpop.f32.mrf.mxu0
    %v349 = vadd.f32 0.0, %v348
    %350 = vmatmul.f32.gmra.mxu0 %v162
    %v351 = vpop.f32.mrf.mxu0
    %v352 = vadd.f32 0.0, %v351
    %353 = vdwg.mxu0
    %354 = vmatpush.msra.mxu0 0.0
    %355 = vmatpush.msra.mxu0 0.0
    %356 = vmatpush.msra.mxu0 0.0
    %357 = vmatpush.msra.mxu0 0.0
    %358 = vmatpush.msra.mxu0 0.0
    %359 = vmatpush.msra.mxu0 0.0
    %360 = vmatpush.msra.mxu0 0.0
    %361 = vmatpush.msra.mxu0 0.0
    %362 = vmatpush.msra.mxu0 0.0
    %363 = vmatpush.msra.mxu0 0.0
    %364 = vmatpush.msra.mxu0 0.0
    %365 = vmatpush.msra.mxu0 0.0
    %366 = vmatpush.msra.mxu0 0.0
    %367 = vmatpush.msra.mxu0 %v58
    %368 = vmatpush.msra.mxu0 %v55
    %369 = vmatpush.msra.mxu0 %v52
    %370 = vmatmul.f32.gmra.mxu0 %v87
    %v371 = vpop.f32.mrf.mxu0
    %v372 = vadd.f32 0.0, %v371
    %373 = vmatmul.f32.gmra.mxu0 %v90
    %v374 = vpop.f32.mrf.mxu0
    %v375 = vadd.f32 0.0, %v374
    %376 = vmatmul.f32.gmra.mxu0 %v93
    %v377 = vpop.f32.mrf.mxu0
    %v378 = vadd.f32 0.0, %v377
    %379 = vmatmul.f32.gmra.mxu0 %v96
    %v380 = vpop.f32.mrf.mxu0
    %v381 = vadd.f32 0.0, %v380
    %382 = vmatmul.f32.gmra.mxu0 %v99
    %v383 = vpop.f32.mrf.mxu0
    %v384 = vadd.f32 0.0, %v383
    %385 = vmatmul.f32.gmra.mxu0 %v102
    %v386 = vpop.f32.mrf.mxu0
    %v387 = vadd.f32 0.0, %v386
    %388 = vmatmul.f32.gmra.mxu0 %v105
    %v389 = vpop.f32.mrf.mxu0
    %v390 = vadd.f32 0.0, %v389
    %391 = vmatmul.f32.gmra.mxu0 %v108
    %v392 = vpop.f32.mrf.mxu0
    %v393 = vadd.f32 0.0, %v392
    %394 = vmatmul.f32.gmra.mxu0 %v111
    %v395 = vpop.f32.mrf.mxu0
    %v396 = vadd.f32 0.0, %v395
    %397 = vmatmul.f32.gmra.mxu0 %v114
    %v398 = vpop.f32.mrf.mxu0
    %v399 = vadd.f32 0.0, %v398
    %400 = vmatmul.f32.gmra.mxu0 %v117
    %v401 = vpop.f32.mrf.mxu0
    %v402 = vadd.f32 0.0, %v401
    %403 = vmatmul.f32.gmra.mxu0 %v120
    %v404 = vpop.f32.mrf.mxu0
    %v405 = vadd.f32 0.0, %v404
    %406 = vmatmul.f32.gmra.mxu0 %v123
    %v407 = vpop.f32.mrf.mxu0
    %v408 = vadd.f32 0.0, %v407
    %409 = vmatmul.f32.gmra.mxu0 %v126
    %v410 = vpop.f32.mrf.mxu0
    %v411 = vadd.f32 0.0, %v410
    %412 = vmatmul.f32.gmra.mxu0 %v129
    %v413 = vpop.f32.mrf.mxu0
    %v414 = vadd.f32 0.0, %v413
    %415 = vmatmul.f32.gmra.mxu0 %v132
    %v416 = vpop.f32.mrf.mxu0
    %v417 = vadd.f32 0.0, %v416
    %418 = vmatmul.f32.gmra.mxu0 %v135
    %v419 = vpop.f32.mrf.mxu0
    %v420 = vadd.f32 0.0, %v419
    %421 = vmatmul.f32.gmra.mxu0 %v138
    %v422 = vpop.f32.mrf.mxu0
    %v423 = vadd.f32 0.0, %v422
    %424 = vmatmul.f32.gmra.mxu0 %v141
    %v425 = vpop.f32.mrf.mxu0
    %v426 = vadd.f32 0.0, %v425
    %427 = vmatmul.f32.gmra.mxu0 %v144
    %v428 = vpop.f32.mrf.mxu0
    %v429 = vadd.f32 0.0, %v428
    %430 = vmatmul.f32.gmra.mxu0 %v147
    %v431 = vpop.f32.mrf.mxu0
    %v432 = vadd.f32 0.0, %v431
    %433 = vmatmul.f32.gmra.mxu0 %v150
    %v434 = vpop.f32.mrf.mxu0
    %v435 = vadd.f32 0.0, %v434
    %436 = vmatmul.f32.gmra.mxu0 %v153
    %v437 = vpop.f32.mrf.mxu0
    %v438 = vadd.f32 0.0, %v437
    %439 = vmatmul.f32.gmra.mxu0 %v156
    %v440 = vpop.f32.mrf.mxu0
    %v441 = vadd.f32 0.0, %v440
    %442 = vmatmul.f32.gmra.mxu0 %v159
    %v443 = vpop.f32.mrf.mxu0
    %v444 = vadd.f32 0.0, %v443
    %445 = vmatmul.f32.gmra.mxu0 %v162
    %v446 = vpop.f32.mrf.mxu0
    %v447 = vadd.f32 0.0, %v446
    %448 = vdwg.mxu0
    %v449 = vld [vmem:[%s2] sm:$0xff]
    %v450 = vld [vmem:[%s2 + $0x8] sm:$0xf]
    %v451 = vld [vmem:[%s2 + $0xc] sm:$0xff]
    %v452 = vld [vmem:[%s2 + $0x14] sm:$0xf]
    %v453 = vld [vmem:[%s2 + $0x18] sm:$0xff]
    %v454 = vld [vmem:[%s2 + $0x20] sm:$0xf]
    %v455 = vld [vmem:[%s2 + $0x24] sm:$0xff]
    %v456 = vld [vmem:[%s2 + $0x2c] sm:$0xf]
    %v457 = vld [vmem:[%s2 + $0x30] sm:$0xff]
    %v458 = vld [vmem:[%s2 + $0x38] sm:$0xf]
    %v459 = vld [vmem:[%s2 + $0x3c] sm:$0xff]
    %v460 = vld [vmem:[%s2 + $0x44] sm:$0xf]
    %v461 = vld [vmem:[%s2 + $0x48] sm:$0xff]
    %v462 = vld [vmem:[%s2 + $0x50] sm:$0xf]
    %v463 = vld [vmem:[%s2 + $0x54] sm:$0xff]
    %v464 = vld [vmem:[%s2 + $0x5c] sm:$0xf]
    %v465 = vld [vmem:[%s2 + $0x60] sm:$0xff]
    %v466 = vld [vmem:[%s2 + $0x68] sm:$0xf]
    %v467 = vld [vmem:[%s2 + $0x6c] sm:$0xff]
    %v468 = vld [vmem:[%s2 + $0x74] sm:$0xf]
    %v469 = vld [vmem:[%s2 + $0x78] sm:$0xff]
    %v470 = vld [vmem:[%s2 + $0x80] sm:$0xf]
    %v471 = vld [vmem:[%s2 + $0x84] sm:$0xff]
    %v472 = vld [vmem:[%s2 + $0x8c] sm:$0xf]
    %v473 = vld [vmem:[%s2 + $0x90] sm:$0xff]
    %v474 = vld [vmem:[%s2 + $0x98] sm:$0xf]
    %v475 = vld [vmem:[%s2 + $0x9c] sm:$0xff]
    %v476 = vld [vmem:[%s2 + $0xa4] sm:$0xf]
    %v477 = vld [vmem:[%s2 + $0xa8] sm:$0xff]
    %v478 = vld [vmem:[%s2 + $0xb0] sm:$0xf]
    %v479 = vld [vmem:[%s2 + $0xb4] sm:$0xff]
    %v480 = vld [vmem:[%s2 + $0xbc] sm:$0xf]
    %v481 = vld [vmem:[%s2 + $0xc0] sm:$0xff]
    %v482 = vld [vmem:[%s2 + $0xc8] sm:$0xf]
    %v483 = vld [vmem:[%s2 + $0xcc] sm:$0xff]
    %v484 = vld [vmem:[%s2 + $0xd4] sm:$0xf]
    %v485 = vld [vmem:[%s2 + $0xd8] sm:$0xff]
    %v486 = vld [vmem:[%s2 + $0xe0] sm:$0xf]
    %v487 = vld [vmem:[%s2 + $0xe4] sm:$0xff]
    %v488 = vld [vmem:[%s2 + $0xec] sm:$0xf]
    %v489 = vld [vmem:[%s2 + $0xf0] sm:$0xff]
    %v490 = vld [vmem:[%s2 + $0xf8] sm:$0xf]
    %v491 = vld [vmem:[%s2 + $0xfc] sm:$0xff]
    %v492 = vld [vmem:[%s2 + $0x104] sm:$0xf]
    %v493 = vld [vmem:[%s2 + $0x108] sm:$0xff]
    %v494 = vld [vmem:[%s2 + $0x110] sm:$0xf]
    %v495 = vld [vmem:[%s2 + $0x114] sm:$0xff]
    %v496 = vld [vmem:[%s2 + $0x11c] sm:$0xf]
    %v497 = vld [vmem:[%s2 + $0x120] sm:$0xff]
    %v498 = vld [vmem:[%s2 + $0x128] sm:$0xf]
    %v499 = vld [vmem:[%s2 + $0x12c] sm:$0xff]
    %v500 = vld [vmem:[%s2 + $0x134] sm:$0xf]
    %v501 = vunpack.c.l.bf16 %v449
    %v502 = vunpack.c.h.bf16 %v449
    %v503 = vunpack.c.l.bf16 %v450
    %v504 = vunpack.c.l.bf16 %v451
    %v505 = vunpack.c.h.bf16 %v451
    %v506 = vunpack.c.l.bf16 %v452
    %v507 = vunpack.c.l.bf16 %v453
    %v508 = vunpack.c.h.bf16 %v453
    %v509 = vunpack.c.l.bf16 %v454
    %v510 = vunpack.c.l.bf16 %v455
    %v511 = vunpack.c.h.bf16 %v455
    %v512 = vunpack.c.l.bf16 %v456
    %v513 = vunpack.c.l.bf16 %v457
    %v514 = vunpack.c.h.bf16 %v457
    %v515 = vunpack.c.l.bf16 %v458
    %v516 = vunpack.c.l.bf16 %v459
    %v517 = vunpack.c.h.bf16 %v459
    %v518 = vunpack.c.l.bf16 %v460
    %v519 = vunpack.c.l.bf16 %v461
    %v520 = vunpack.c.h.bf16 %v461
    %v521 = vunpack.c.l.bf16 %v462
    %v522 = vunpack.c.l.bf16 %v463
    %v523 = vunpack.c.h.bf16 %v463
    %v524 = vunpack.c.l.bf16 %v464
    %v525 = vunpack.c.l.bf16 %v465
    %v526 = vunpack.c.h.bf16 %v465
    %v527 = vunpack.c.l.bf16 %v466
    %v528 = vunpack.c.l.bf16 %v467
    %v529 = vunpack.c.h.bf16 %v467
    %v530 = vunpack.c.l.bf16 %v468
    %v531 = vunpack.c.l.bf16 %v469
    %v532 = vunpack.c.h.bf16 %v469
    %v533 = vunpack.c.l.bf16 %v470
    %v534 = vunpack.c.l.bf16 %v471
    %v535 = vunpack.c.h.bf16 %v471
    %v536 = vunpack.c.l.bf16 %v472
    %v537 = vunpack.c.l.bf16 %v473
    %v538 = vunpack.c.h.bf16 %v473
    %v539 = vunpack.c.l.bf16 %v474
    %v540 = vunpack.c.l.bf16 %v475
    %v541 = vunpack.c.h.bf16 %v475
    %v542 = vunpack.c.l.bf16 %v476
    %v543 = vunpack.c.l.bf16 %v477
    %v544 = vunpack.c.h.bf16 %v477
    %v545 = vunpack.c.l.bf16 %v478
    %v546 = vunpack.c.l.bf16 %v479
    %v547 = vunpack.c.h.bf16 %v479
    %v548 = vunpack.c.l.bf16 %v480
    %v549 = vunpack.c.l.bf16 %v481
    %v550 = vunpack.c.h.bf16 %v481
    %v551 = vunpack.c.l.bf16 %v482
    %v552 = vunpack.c.l.bf16 %v483
    %v553 = vunpack.c.h.bf16 %v483
    %v554 = vunpack.c.l.bf16 %v484
    %v555 = vunpack.c.l.bf16 %v485
    %v556 = vunpack.c.h.bf16 %v485
    %v557 = vunpack.c.l.bf16 %v486
    %v558 = vunpack.c.l.bf16 %v487
    %v559 = vunpack.c.h.bf16 %v487
    %v560 = vunpack.c.l.bf16 %v488
    %v561 = vunpack.c.l.bf16 %v489
    %v562 = vunpack.c.h.bf16 %v489
    %v563 = vunpack.c.l.bf16 %v490
    %v564 = vunpack.c.l.bf16 %v491
    %v565 = vunpack.c.h.bf16 %v491
    %v566 = vunpack.c.l.bf16 %v492
    %v567 = vunpack.c.l.bf16 %v493
    %v568 = vunpack.c.h.bf16 %v493
    %v569 = vunpack.c.l.bf16 %v494
    %v570 = vunpack.c.l.bf16 %v495
    %v571 = vunpack.c.h.bf16 %v495
    %v572 = vunpack.c.l.bf16 %v496
    %v573 = vunpack.c.l.bf16 %v497
    %v574 = vunpack.c.h.bf16 %v497
    %v575 = vunpack.c.l.bf16 %v498
    %v576 = vunpack.c.l.bf16 %v499
    %v577 = vunpack.c.h.bf16 %v499
    %v578 = vunpack.c.l.bf16 %v500
    %v579 = vmul.f32 %v182, 1.442695
    %v580 = vpow.pop %v579
    %v581 = vmul.f32 %v277, 1.442695
    %v582 = vpow.pop %v581
    %v583 = vmul.f32 %v372, 1.442695
    %v584 = vpow.pop %v583
    %v585 = vmul.f32 %v185, 1.442695
    %v586 = vpow.pop %v585
    %v587 = vmul.f32 %v280, 1.442695
    %v588 = vpow.pop %v587
    %v589 = vmul.f32 %v375, 1.442695
    %v590 = vpow.pop %v589
    %v591 = vmul.f32 %v188, 1.442695
    %v592 = vpow.pop %v591
    %v593 = vmul.f32 %v283, 1.442695
    %v594 = vpow.pop %v593
    %v595 = vmul.f32 %v378, 1.442695
    %v596 = vpow.pop %v595
    %v597 = vmul.f32 %v191, 1.442695
    %v598 = vpow.pop %v597
    %v599 = vmul.f32 %v286, 1.442695
    %v600 = vpow.pop %v599
    %v601 = vmul.f32 %v381, 1.442695
    %v602 = vpow.pop %v601
    %v603 = vmul.f32 %v194, 1.442695
    %v604 = vpow.pop %v603
    %v605 = vmul.f32 %v289, 1.442695
    %v606 = vpow.pop %v605
    %v607 = vmul.f32 %v384, 1.442695
    %v608 = vpow.pop %v607
    %v609 = vmul.f32 %v197, 1.442695
    %v610 = vpow.pop %v609
    %v611 = vmul.f32 %v292, 1.442695
    %v612 = vpow.pop %v611
    %v613 = vmul.f32 %v387, 1.442695
    %v614 = vpow.pop %v613
    %v615 = vmul.f32 %v200, 1.442695
    %v616 = vpow.pop %v615
    %v617 = vmul.f32 %v295, 1.442695
    %v618 = vpow.pop %v617
    %v619 = vmul.f32 %v390, 1.442695
    %v620 = vpow.pop %v619
    %v621 = vmul.f32 %v203, 1.442695
    %v622 = vpow.pop %v621
    %v623 = vmul.f32 %v298, 1.442695
    %v624 = vpow.pop %v623
    %v625 = vmul.f32 %v393, 1.442695
    %v626 = vpow.pop %v625
    %v627 = vmul.f32 %v206, 1.442695
    %v628 = vpow.pop %v627
    %v629 = vmul.f32 %v301, 1.442695
    %v630 = vpow.pop %v629
    %v631 = vmul.f32 %v396, 1.442695
    %v632 = vpow.pop %v631
    %v633 = vmul.f32 %v209, 1.442695
    %v634 = vpow.pop %v633
    %v635 = vmul.f32 %v304, 1.442695
    %v636 = vpow.pop %v635
    %v637 = vmul.f32 %v399, 1.442695
    %v638 = vpow.pop %v637
    %v639 = vmul.f32 %v212, 1.442695
    %v640 = vpow.pop %v639
    %v641 = vmul.f32 %v307, 1.442695
    %v642 = vpow.pop %v641
    %v643 = vmul.f32 %v402, 1.442695
    %v644 = vpow.pop %v643
    %v645 = vmul.f32 %v215, 1.442695
    %v646 = vpow.pop %v645
    %v647 = vmul.f32 %v310, 1.442695
    %v648 = vpow.pop %v647
    %v649 = vmul.f32 %v405, 1.442695
    %v650 = vpow.pop %v649
    %v651 = vmul.f32 %v218, 1.442695
    %v652 = vpow.pop %v651
    %v653 = vmul.f32 %v313, 1.442695
    %v654 = vpow.pop %v653
    %v655 = vmul.f32 %v408, 1.442695
    %v656 = vpow.pop %v655
    %v657 = vmul.f32 %v221, 1.442695
    %v658 = vpow.pop %v657
    %v659 = vmul.f32 %v316, 1.442695
    %v660 = vpow.pop %v659
    %v661 = vmul.f32 %v411, 1.442695
    %v662 = vpow.pop %v661
    %v663 = vmul.f32 %v224, 1.442695
    %v664 = vpow.pop %v663
    %v665 = vmul.f32 %v319, 1.442695
    %v666 = vpow.pop %v665
    %v667 = vmul.f32 %v414, 1.442695
    %v668 = vpow.pop %v667
    %v669 = vmul.f32 %v227, 1.442695
    %v670 = vpow.pop %v669
    %v671 = vmul.f32 %v322, 1.442695
    %v672 = vpow.pop %v671
    %v673 = vmul.f32 %v417, 1.442695
    %v674 = vpow.pop %v673
    %v675 = vmul.f32 %v230, 1.442695
    %v676 = vpow.pop %v675
    %v677 = vmul.f32 %v325, 1.442695
    %v678 = vpow.pop %v677
    %v679 = vmul.f32 %v420, 1.442695
    %v680 = vpow.pop %v679
    %v681 = vmul.f32 %v233, 1.442695
    %v682 = vpow.pop %v681
    %v683 = vmul.f32 %v328, 1.442695
    %v684 = vpow.pop %v683
    %v685 = vmul.f32 %v423, 1.442695
    %v686 = vpow.pop %v685
    %v687 = vmul.f32 %v236, 1.442695
    %v688 = vpow.pop %v687
    %v689 = vmul.f32 %v331, 1.442695
    %v690 = vpow.pop %v689
    %v691 = vmul.f32 %v426, 1.442695
    %v692 = vpow.pop %v691
    %v693 = vmul.f32 %v239, 1.442695
    %v694 = vpow.pop %v693
    %v695 = vmul.f32 %v334, 1.442695
    %v696 = vpow.pop %v695
    %v697 = vmul.f32 %v429, 1.442695
    %v698 = vpow.pop %v697
    %v699 = vmul.f32 %v242, 1.442695
    %v700 = vpow.pop %v699
    %v701 = vmul.f32 %v337, 1.442695
    %v702 = vpow.pop %v701
    %v703 = vmul.f32 %v432, 1.442695
    %v704 = vpow.pop %v703
    %v705 = vmul.f32 %v245, 1.442695
    %v706 = vpow.pop %v705
    %v707 = vmul.f32 %v340, 1.442695
    %v708 = vpow.pop %v707
    %v709 = vmul.f32 %v435, 1.442695
    %v710 = vpow.pop %v709
    %v711 = vmul.f32 %v248, 1.442695
    %v712 = vpow.pop %v711
    %v713 = vmul.f32 %v343, 1.442695
    %v714 = vpow.pop %v713
    %v715 = vmul.f32 %v438, 1.442695
    %v716 = vpow.pop %v715
    %v717 = vmul.f32 %v251, 1.442695
    %v718 = vpow.pop %v717
    %v719 = vmul.f32 %v346, 1.442695
    %v720 = vpow.pop %v719
    %v721 = vmul.f32 %v441, 1.442695
    %v722 = vpow.pop %v721
    %v723 = vmul.f32 %v254, 1.442695
    %v724 = vpow.pop %v723
    %v725 = vmul.f32 %v349, 1.442695
    %v726 = vpow.pop %v725
    %v727 = vmul.f32 %v444, 1.442695
    %v728 = vpow.pop %v727
    %v729 = vmul.f32 %v257, 1.442695
    %v730 = vpow.pop %v729
    %v731 = vmul.f32 %v352, 1.442695
    %v732 = vpow.pop %v731
    %v733 = vmul.f32 %v447, 1.442695
    %v734 = vpow.pop %v733
    %v735 = vmul.f32 %v501, %v182
    %v736 = vmul.f32 %v502, %v277
    %v737 = vmul.f32 %v503, %v372
    %v738 = vmul.f32 %v504, %v185
    %v739 = vmul.f32 %v505, %v280
    %v740 = vmul.f32 %v506, %v375
    %v741 = vmul.f32 %v507, %v188
    %v742 = vmul.f32 %v508, %v283
    %v743 = vmul.f32 %v509, %v378
    %v744 = vmul.f32 %v510, %v191
    %v745 = vmul.f32 %v511, %v286
    %v746 = vmul.f32 %v512, %v381
    %v747 = vmul.f32 %v513, %v194
    %v748 = vmul.f32 %v514, %v289
    %v749 = vmul.f32 %v515, %v384
    %v750 = vmul.f32 %v516, %v197
    %v751 = vmul.f32 %v517, %v292
    %v752 = vmul.f32 %v518, %v387
    %v753 = vmul.f32 %v519, %v200
    %v754 = vmul.f32 %v520, %v295
    %v755 = vmul.f32 %v521, %v390
    %v756 = vmul.f32 %v522, %v203
    %v757 = vmul.f32 %v523, %v298
    %v758 = vmul.f32 %v524, %v393
    %v759 = vmul.f32 %v525, %v206
    %v760 = vmul.f32 %v526, %v301
    %v761 = vmul.f32 %v527, %v396
    %v762 = vmul.f32 %v528, %v209
    %v763 = vmul.f32 %v529, %v304
    %v764 = vmul.f32 %v530, %v399
    %v765 = vmul.f32 %v531, %v212
    %v766 = vmul.f32 %v532, %v307
    %v767 = vmul.f32 %v533, %v402
    %v768 = vmul.f32 %v534, %v215
    %v769 = vmul.f32 %v535, %v310
    %v770 = vmul.f32 %v536, %v405
    %v771 = vmul.f32 %v537, %v218
    %v772 = vmul.f32 %v538, %v313
    %v773 = vmul.f32 %v539, %v408
    %v774 = vmul.f32 %v540, %v221
    %v775 = vmul.f32 %v541, %v316
    %v776 = vmul.f32 %v542, %v411
    %v777 = vmul.f32 %v543, %v224
    %v778 = vmul.f32 %v544, %v319
    %v779 = vmul.f32 %v545, %v414
    %v780 = vmul.f32 %v546, %v227
    %v781 = vmul.f32 %v547, %v322
    %v782 = vmul.f32 %v548, %v417
    %v783 = vmul.f32 %v549, %v230
    %v784 = vmul.f32 %v550, %v325
    %v785 = vmul.f32 %v551, %v420
    %v786 = vmul.f32 %v552, %v233
    %v787 = vmul.f32 %v553, %v328
    %v788 = vmul.f32 %v554, %v423
    %v789 = vmul.f32 %v555, %v236
    %v790 = vmul.f32 %v556, %v331
    %v791 = vmul.f32 %v557, %v426
    %v792 = vmul.f32 %v558, %v239
    %v793 = vmul.f32 %v559, %v334
    %v794 = vmul.f32 %v560, %v429
    %v795 = vmul.f32 %v561, %v242
    %v796 = vmul.f32 %v562, %v337
    %v797 = vmul.f32 %v563, %v432
    %v798 = vmul.f32 %v564, %v245
    %v799 = vmul.f32 %v565, %v340
    %v800 = vmul.f32 %v566, %v435
    %v801 = vmul.f32 %v567, %v248
    %v802 = vmul.f32 %v568, %v343
    %v803 = vmul.f32 %v569, %v438
    %v804 = vmul.f32 %v570, %v251
    %v805 = vmul.f32 %v571, %v346
    %v806 = vmul.f32 %v572, %v441
    %v807 = vmul.f32 %v573, %v254
    %v808 = vmul.f32 %v574, %v349
    %v809 = vmul.f32 %v575, %v444
    %v810 = vmul.f32 %v576, %v257
    %v811 = vmul.f32 %v577, %v352
    %v812 = vmul.f32 %v578, %v447
    %v813 = vsub.f32 %v580, %v735
    %v814 = vsub.f32 %v582, %v736
    %v815 = vsub.f32 %v584, %v737
    %v816 = vsub.f32 %v586, %v738
    %v817 = vsub.f32 %v588, %v739
    %v818 = vsub.f32 %v590, %v740
    %v819 = vsub.f32 %v592, %v741
    %v820 = vsub.f32 %v594, %v742
    %v821 = vsub.f32 %v596, %v743
    %v822 = vsub.f32 %v598, %v744
    %v823 = vsub.f32 %v600, %v745
    %v824 = vsub.f32 %v602, %v746
    %v825 = vsub.f32 %v604, %v747
    %v826 = vsub.f32 %v606, %v748
    %v827 = vsub.f32 %v608, %v749
    %v828 = vsub.f32 %v610, %v750
    %v829 = vsub.f32 %v612, %v751
    %v830 = vsub.f32 %v614, %v752
    %v831 = vsub.f32 %v616, %v753
    %v832 = vsub.f32 %v618, %v754
    %v833 = vsub.f32 %v620, %v755
    %v834 = vsub.f32 %v622, %v756
    %v835 = vsub.f32 %v624, %v757
    %v836 = vsub.f32 %v626, %v758
    %v837 = vsub.f32 %v628, %v759
    %v838 = vsub.f32 %v630, %v760
    %v839 = vsub.f32 %v632, %v761
    %v840 = vsub.f32 %v634, %v762
    %v841 = vsub.f32 %v636, %v763
    %v842 = vsub.f32 %v638, %v764
    %v843 = vsub.f32 %v640, %v765
    %v844 = vsub.f32 %v642, %v766
    %v845 = vsub.f32 %v644, %v767
    %v846 = vsub.f32 %v646, %v768
    %v847 = vsub.f32 %v648, %v769
    %v848 = vsub.f32 %v650, %v770
    %v849 = vsub.f32 %v652, %v771
    %v850 = vsub.f32 %v654, %v772
    %v851 = vsub.f32 %v656, %v773
    %v852 = vsub.f32 %v658, %v774
    %v853 = vsub.f32 %v660, %v775
    %v854 = vsub.f32 %v662, %v776
    %v855 = vsub.f32 %v664, %v777
    %v856 = vsub.f32 %v666, %v778
    %v857 = vsub.f32 %v668, %v779
    %v858 = vsub.f32 %v670, %v780
    %v859 = vsub.f32 %v672, %v781
    %v860 = vsub.f32 %v674, %v782
    %v861 = vsub.f32 %v676, %v783
    %v862 = vsub.f32 %v678, %v784
    %v863 = vsub.f32 %v680, %v785
    %v864 = vsub.f32 %v682, %v786
    %v865 = vsub.f32 %v684, %v787
    %v866 = vsub.f32 %v686, %v788
    %v867 = vsub.f32 %v688, %v789
    %v868 = vsub.f32 %v690, %v790
    %v869 = vsub.f32 %v692, %v791
    %v870 = vsub.f32 %v694, %v792
    %v871 = vsub.f32 %v696, %v793
    %v872 = vsub.f32 %v698, %v794
    %v873 = vsub.f32 %v700, %v795
    %v874 = vsub.f32 %v702, %v796
    %v875 = vsub.f32 %v704, %v797
    %v876 = vsub.f32 %v706, %v798
    %v877 = vsub.f32 %v708, %v799
    %v878 = vsub.f32 %v710, %v800
    %v879 = vsub.f32 %v712, %v801
    %v880 = vsub.f32 %v714, %v802
    %v881 = vsub.f32 %v716, %v803
    %v882 = vsub.f32 %v718, %v804
    %v883 = vsub.f32 %v720, %v805
    %v884 = vsub.f32 %v722, %v806
    %v885 = vsub.f32 %v724, %v807
    %v886 = vsub.f32 %v726, %v808
    %v887 = vsub.f32 %v728, %v809
    %v888 = vsub.f32 %v730, %v810
    %v889 = vsub.f32 %v732, %v811
    %v890 = vsub.f32 %v734, %v812
    %p891 = scmp.eq.s32.totalorder 0, 0
    %p892 = por %p891, %p15
    // Predicated region
    $region18: #{tpu_custom_call.1} parent=1 // pred_check
      %p893 = pneg %p892
    $region19: #{tpu_custom_call.1} parent=1 // pred_check_branch
      %895 = sbr.rel (%p893) target = $region21
    $region20: #{tpu_custom_call.1} parent=1 // pred_region
      %v896 = vlaneseq
      %v897 = vshrl.u32 %v896, 7
      %v898 = vadd.s32 %v897, 8
      %v899 = vadd.s32 %v897, 16
      %v900 = vadd.s32 %v897, 24
      %v901 = vadd.s32 %v897, 32
      %v902 = vadd.s32 %v897, 40
      %v903 = vadd.s32 %v897, 48
      %v904 = vadd.s32 %v897, 56
      %v905 = vadd.s32 %v897, 64
      %v906 = vadd.s32 %v897, 72
      %v907 = vadd.s32 %v897, 80
      %v908 = vadd.s32 %v897, 88
      %v909 = vadd.s32 %v897, 96
      %v910 = vadd.s32 %v897, 104
      %v911 = vadd.s32 %v897, 112
      %v912 = vadd.s32 %v897, 120
      %v913 = vadd.s32 %v897, 128
      %v914 = vadd.s32 %v897, 136
      %v915 = vadd.s32 %v897, 144
      %v916 = vadd.s32 %v897, 152
      %v917 = vadd.s32 %v897, 160
      %v918 = vadd.s32 %v897, 168
      %v919 = vadd.s32 %v897, 176
      %v920 = vadd.s32 %v897, 184
      %v921 = vadd.s32 %v897, 192
      %v922 = vadd.s32 %v897, 200
      %s923 = smul.u32 0, 208
      %v924 = vstv %s923
      %v925 = vadd.s32 %v897, %v924
      %v926 = vadd.s32 %v898, %v924
      %v927 = vadd.s32 %v899, %v924
      %v928 = vadd.s32 %v900, %v924
      %v929 = vadd.s32 %v901, %v924
      %v930 = vadd.s32 %v902, %v924
      %v931 = vadd.s32 %v903, %v924
      %v932 = vadd.s32 %v904, %v924
      %v933 = vadd.s32 %v905, %v924
      %v934 = vadd.s32 %v906, %v924
      %v935 = vadd.s32 %v907, %v924
      %v936 = vadd.s32 %v908, %v924
      %v937 = vadd.s32 %v909, %v924
      %v938 = vadd.s32 %v910, %v924
      %v939 = vadd.s32 %v911, %v924
      %v940 = vadd.s32 %v912, %v924
      %v941 = vadd.s32 %v913, %v924
      %v942 = vadd.s32 %v914, %v924
      %v943 = vadd.s32 %v915, %v924
      %v944 = vadd.s32 %v916, %v924
      %v945 = vadd.s32 %v917, %v924
      %v946 = vadd.s32 %v918, %v924
      %v947 = vadd.s32 %v919, %v924
      %v948 = vadd.s32 %v920, %v924
      %v949 = vadd.s32 %v921, %v924
      %v950 = vadd.s32 %v922, %v924
      %vm951 = vcmp.lt.s32.totalorder %v925, 200
      %vm952 = vcmp.lt.s32.totalorder %v926, 200
      %vm953 = vcmp.lt.s32.totalorder %v927, 200
      %vm954 = vcmp.lt.s32.totalorder %v928, 200
      %vm955 = vcmp.lt.s32.totalorder %v929, 200
      %vm956 = vcmp.lt.s32.totalorder %v930, 200
      %vm957 = vcmp.lt.s32.totalorder %v931, 200
      %vm958 = vcmp.lt.s32.totalorder %v932, 200
      %vm959 = vcmp.lt.s32.totalorder %v933, 200
      %vm960 = vcmp.lt.s32.totalorder %v934, 200
      %vm961 = vcmp.lt.s32.totalorder %v935, 200
      %vm962 = vcmp.lt.s32.totalorder %v936, 200
      %vm963 = vcmp.lt.s32.totalorder %v937, 200
      %vm964 = vcmp.lt.s32.totalorder %v938, 200
      %vm965 = vcmp.lt.s32.totalorder %v939, 200
      %vm966 = vcmp.lt.s32.totalorder %v940, 200
      %vm967 = vcmp.lt.s32.totalorder %v941, 200
      %vm968 = vcmp.lt.s32.totalorder %v942, 200
      %vm969 = vcmp.lt.s32.totalorder %v943, 200
      %vm970 = vcmp.lt.s32.totalorder %v944, 200
      %vm971 = vcmp.lt.s32.totalorder %v945, 200
      %vm972 = vcmp.lt.s32.totalorder %v946, 200
      %vm973 = vcmp.lt.s32.totalorder %v947, 200
      %vm974 = vcmp.lt.s32.totalorder %v948, 200
      %vm975 = vcmp.lt.s32.totalorder %v949, 200
      %vm976 = vcmp.lt.s32.totalorder %v950, 200
      %v977 = vlaneseq
      %v978 = vand.u32 %v977, 127
      %v979 = vadd.s32 %v978, 128
      %v980 = vadd.s32 %v978, 256
      %v981 = vstv %s45
      %v982 = vadd.s32 %v978, %v981
      %v983 = vadd.s32 %v979, %v981
      %v984 = vadd.s32 %v980, %v981
      %vm985 = vcmp.lt.s32.totalorder %v982, 272
      %vm986 = vcmp.lt.s32.totalorder %v983, 272
      %vm987 = vcmp.lt.s32.totalorder %v984, 272
      %vm988 = vmand %vm951, %vm985
      %vm989 = vmand %vm951, %vm986
      %vm990 = vmand %vm951, %vm987
      %vm991 = vmand %vm952, %vm985
      %vm992 = vmand %vm952, %vm986
      %vm993 = vmand %vm952, %vm987
      %vm994 = vmand %vm953, %vm985
      %vm995 = vmand %vm953, %vm986
      %vm996 = vmand %vm953, %vm987
      %vm997 = vmand %vm954, %vm985
      %vm998 = vmand %vm954, %vm986
      %vm999 = vmand %vm954, %vm987
      %vm1000 = vmand %vm955, %vm985
      %vm1001 = vmand %vm955, %vm986
      %vm1002 = vmand %vm955, %vm987
      %vm1003 = vmand %vm956, %vm985
      %vm1004 = vmand %vm956, %vm986
      %vm1005 = vmand %vm956, %vm987
      %vm1006 = vmand %vm957, %vm985
      %vm1007 = vmand %vm957, %vm986
      %vm1008 = vmand %vm957, %vm987
      %vm1009 = vmand %vm958, %vm985
      %vm1010 = vmand %vm958, %vm986
      %vm1011 = vmand %vm958, %vm987
      %vm1012 = vmand %vm959, %vm985
      %vm1013 = vmand %vm959, %vm986
      %vm1014 = vmand %vm959, %vm987
      %vm1015 = vmand %vm960, %vm985
      %vm1016 = vmand %vm960, %vm986
      %vm1017 = vmand %vm960, %vm987
      %vm1018 = vmand %vm961, %vm985
      %vm1019 = vmand %vm961, %vm986
      %vm1020 = vmand %vm961, %vm987
      %vm1021 = vmand %vm962, %vm985
      %vm1022 = vmand %vm962, %vm986
      %vm1023 = vmand %vm962, %vm987
      %vm1024 = vmand %vm963, %vm985
      %vm1025 = vmand %vm963, %vm986
      %vm1026 = vmand %vm963, %vm987
      %vm1027 = vmand %vm964, %vm985
      %vm1028 = vmand %vm964, %vm986
      %vm1029 = vmand %vm964, %vm987
      %vm1030 = vmand %vm965, %vm985
      %vm1031 = vmand %vm965, %vm986
      %vm1032 = vmand %vm965, %vm987
      %vm1033 = vmand %vm966, %vm985
      %vm1034 = vmand %vm966, %vm986
      %vm1035 = vmand %vm966, %vm987
      %vm1036 = vmand %vm967, %vm985
      %vm1037 = vmand %vm967, %vm986
      %vm1038 = vmand %vm967, %vm987
      %vm1039 = vmand %vm968, %vm985
      %vm1040 = vmand %vm968, %vm986
      %vm1041 = vmand %vm968, %vm987
      %vm1042 = vmand %vm969, %vm985
      %vm1043 = vmand %vm969, %vm986
      %vm1044 = vmand %vm969, %vm987
      %vm1045 = vmand %vm970, %vm985
      %vm1046 = vmand %vm970, %vm986
      %vm1047 = vmand %vm970, %vm987
      %vm1048 = vmand %vm971, %vm985
      %vm1049 = vmand %vm971, %vm986
      %vm1050 = vmand %vm971, %vm987
      %vm1051 = vmand %vm972, %vm985
      %vm1052 = vmand %vm972, %vm986
      %vm1053 = vmand %vm972, %vm987
      %vm1054 = vmand %vm973, %vm985
      %vm1055 = vmand %vm973, %vm986
      %vm1056 = vmand %vm973, %vm987
      %vm1057 = vmand %vm974, %vm985
      %vm1058 = vmand %vm974, %vm986
      %vm1059 = vmand %vm974, %vm987
      %vm1060 = vmand %vm975, %vm985
      %vm1061 = vmand %vm975, %vm986
      %vm1062 = vmand %vm975, %vm987
      %vm1063 = vmand %vm976, %vm985
      %vm1064 = vmand %vm976, %vm986
      %vm1065 = vmand %vm976, %vm987
      %v1066 = vld [vmem:[#allocation2] sm:$0xff]
      %v1067 = vld [vmem:[#allocation2 + $0x8] sm:$0xff]
      %v1068 = vld [vmem:[#allocation2 + $0x10] sm:$0xff]
      %v1069 = vld [vmem:[#allocation2 + $0x18] sm:$0xff]
      %v1070 = vld [vmem:[#allocation2 + $0x20] sm:$0xff]
      %v1071 = vld [vmem:[#allocation2 + $0x28] sm:$0xff]
      %v1072 = vld [vmem:[#allocation2 + $0x30] sm:$0xff]
      %v1073 = vld [vmem:[#allocation2 + $0x38] sm:$0xff]
      %v1074 = vld [vmem:[#allocation2 + $0x40] sm:$0xff]
      %v1075 = vld [vmem:[#allocation2 + $0x48] sm:$0xff]
      %v1076 = vld [vmem:[#allocation2 + $0x50] sm:$0xff]
      %v1077 = vld [vmem:[#allocation2 + $0x58] sm:$0xff]
      %v1078 = vld [vmem:[#allocation2 + $0x60] sm:$0xff]
      %v1079 = vld [vmem:[#allocation2 + $0x68] sm:$0xff]
      %v1080 = vld [vmem:[#allocation2 + $0x70] sm:$0xff]
      %v1081 = vld [vmem:[#allocation2 + $0x78] sm:$0xff]
      %v1082 = vld [vmem:[#allocation2 + $0x80] sm:$0xff]
      %v1083 = vld [vmem:[#allocation2 + $0x88] sm:$0xff]
      %v1084 = vld [vmem:[#allocation2 + $0x90] sm:$0xff]
      %v1085 = vld [vmem:[#allocation2 + $0x98] sm:$0xff]
      %v1086 = vld [vmem:[#allocation2 + $0xa0] sm:$0xff]
      %v1087 = vld [vmem:[#allocation2 + $0xa8] sm:$0xff]
      %v1088 = vld [vmem:[#allocation2 + $0xb0] sm:$0xff]
      %v1089 = vld [vmem:[#allocation2 + $0xb8] sm:$0xff]
      %v1090 = vld [vmem:[#allocation2 + $0xc0] sm:$0xff]
      %v1091 = vld [vmem:[#allocation2 + $0xc8] sm:$0xff]
      %v1092 = vsel %vm988, %v813, 0.0
      %v1093 = vsel %vm989, %v814, 0.0
      %v1094 = vsel %vm990, %v815, 0.0
      %v1095 = vsel %vm991, %v816, 0.0
      %v1096 = vsel %vm992, %v817, 0.0
      %v1097 = vsel %vm993, %v818, 0.0
      %v1098 = vsel %vm994, %v819, 0.0
      %v1099 = vsel %vm995, %v820, 0.0
      %v1100 = vsel %vm996, %v821, 0.0
      %v1101 = vsel %vm997, %v822, 0.0
      %v1102 = vsel %vm998, %v823, 0.0
      %v1103 = vsel %vm999, %v824, 0.0
      %v1104 = vsel %vm1000, %v825, 0.0
      %v1105 = vsel %vm1001, %v826, 0.0
      %v1106 = vsel %vm1002, %v827, 0.0
      %v1107 = vsel %vm1003, %v828, 0.0
      %v1108 = vsel %vm1004, %v829, 0.0
      %v1109 = vsel %vm1005, %v830, 0.0
      %v1110 = vsel %vm1006, %v831, 0.0
      %v1111 = vsel %vm1007, %v832, 0.0
      %v1112 = vsel %vm1008, %v833, 0.0
      %v1113 = vsel %vm1009, %v834, 0.0
      %v1114 = vsel %vm1010, %v835, 0.0
      %v1115 = vsel %vm1011, %v836, 0.0
      %v1116 = vsel %vm1012, %v837, 0.0
      %v1117 = vsel %vm1013, %v838, 0.0
      %v1118 = vsel %vm1014, %v839, 0.0
      %v1119 = vsel %vm1015, %v840, 0.0
      %v1120 = vsel %vm1016, %v841, 0.0
      %v1121 = vsel %vm1017, %v842, 0.0
      %v1122 = vsel %vm1018, %v843, 0.0
      %v1123 = vsel %vm1019, %v844, 0.0
      %v1124 = vsel %vm1020, %v845, 0.0
      %v1125 = vsel %vm1021, %v846, 0.0
      %v1126 = vsel %vm1022, %v847, 0.0
      %v1127 = vsel %vm1023, %v848, 0.0
      %v1128 = vsel %vm1024, %v849, 0.0
      %v1129 = vsel %vm1025, %v850, 0.0
      %v1130 = vsel %vm1026, %v851, 0.0
      %v1131 = vsel %vm1027, %v852, 0.0
      %v1132 = vsel %vm1028, %v853, 0.0
      %v1133 = vsel %vm1029, %v854, 0.0
      %v1134 = vsel %vm1030, %v855, 0.0
      %v1135 = vsel %vm1031, %v856, 0.0
      %v1136 = vsel %vm1032, %v857, 0.0
      %v1137 = vsel %vm1033, %v858, 0.0
      %v1138 = vsel %vm1034, %v859, 0.0
      %v1139 = vsel %vm1035, %v860, 0.0
      %v1140 = vsel %vm1036, %v861, 0.0
      %v1141 = vsel %vm1037, %v862, 0.0
      %v1142 = vsel %vm1038, %v863, 0.0
      %v1143 = vsel %vm1039, %v864, 0.0
      %v1144 = vsel %vm1040, %v865, 0.0
      %v1145 = vsel %vm1041, %v866, 0.0
      %v1146 = vsel %vm1042, %v867, 0.0
      %v1147 = vsel %vm1043, %v868, 0.0
      %v1148 = vsel %vm1044, %v869, 0.0
      %v1149 = vsel %vm1045, %v870, 0.0
      %v1150 = vsel %vm1046, %v871, 0.0
      %v1151 = vsel %vm1047, %v872, 0.0
      %v1152 = vsel %vm1048, %v873, 0.0
      %v1153 = vsel %vm1049, %v874, 0.0
      %v1154 = vsel %vm1050, %v875, 0.0
      %v1155 = vsel %vm1051, %v876, 0.0
      %v1156 = vsel %vm1052, %v877, 0.0
      %v1157 = vsel %vm1053, %v878, 0.0
      %v1158 = vsel %vm1054, %v879, 0.0
      %v1159 = vsel %vm1055, %v880, 0.0
      %v1160 = vsel %vm1056, %v881, 0.0
      %v1161 = vsel %vm1057, %v882, 0.0
      %v1162 = vsel %vm1058, %v883, 0.0
      %v1163 = vsel %vm1059, %v884, 0.0
      %v1164 = vsel %vm1060, %v885, 0.0
      %v1165 = vsel %vm1061, %v886, 0.0
      %v1166 = vsel %vm1062, %v887, 0.0
      %v1167 = vsel %vm1063, %v888, 0.0
      %v1168 = vsel %vm1064, %v889, 0.0
      %v1169 = vsel %vm1065, %v890, 0.0
      %v1170 = vadd.f32 %v1092, %v1093
      %v1171 = vadd.f32 %v1095, %v1096
      %v1172 = vadd.f32 %v1098, %v1099
      %v1173 = vadd.f32 %v1101, %v1102
      %v1174 = vadd.f32 %v1104, %v1105
      %v1175 = vadd.f32 %v1107, %v1108
      %v1176 = vadd.f32 %v1110, %v1111
      %v1177 = vadd.f32 %v1113, %v1114
      %v1178 = vadd.f32 %v1116, %v1117
      %v1179 = vadd.f32 %v1119, %v1120
      %v1180 = vadd.f32 %v1122, %v1123
      %v1181 = vadd.f32 %v1125, %v1126
      %v1182 = vadd.f32 %v1128, %v1129
      %v1183 = vadd.f32 %v1131, %v1132
      %v1184 = vadd.f32 %v1134, %v1135
      %v1185 = vadd.f32 %v1137, %v1138
      %v1186 = vadd.f32 %v1140, %v1141
      %v1187 = vadd.f32 %v1143, %v1144
      %v1188 = vadd.f32 %v1146, %v1147
      %v1189 = vadd.f32 %v1149, %v1150
      %v1190 = vadd.f32 %v1152, %v1153
      %v1191 = vadd.f32 %v1155, %v1156
      %v1192 = vadd.f32 %v1158, %v1159
      %v1193 = vadd.f32 %v1161, %v1162
      %v1194 = vadd.f32 %v1164, %v1165
      %v1195 = vadd.f32 %v1167, %v1168
      %v1196 = vadd.f32 %v1170, %v1094
      %v1197 = vadd.f32 %v1171, %v1097
      %v1198 = vadd.f32 %v1172, %v1100
      %v1199 = vadd.f32 %v1173, %v1103
      %v1200 = vadd.f32 %v1174, %v1106
      %v1201 = vadd.f32 %v1175, %v1109
      %v1202 = vadd.f32 %v1176, %v1112
      %v1203 = vadd.f32 %v1177, %v1115
      %v1204 = vadd.f32 %v1178, %v1118
      %v1205 = vadd.f32 %v1179, %v1121
      %v1206 = vadd.f32 %v1180, %v1124
      %v1207 = vadd.f32 %v1181, %v1127
      %v1208 = vadd.f32 %v1182, %v1130
      %v1209 = vadd.f32 %v1183, %v1133
      %v1210 = vadd.f32 %v1184, %v1136
      %v1211 = vadd.f32 %v1185, %v1139
      %v1212 = vadd.f32 %v1186, %v1142
      %v1213 = vadd.f32 %v1187, %v1145
      %v1214 = vadd.f32 %v1188, %v1148
      %v1215 = vadd.f32 %v1189, %v1151
      %v1216 = vadd.f32 %v1190, %v1154
      %v1217 = vadd.f32 %v1191, %v1157
      %v1218 = vadd.f32 %v1192, %v1160
      %v1219 = vadd.f32 %v1193, %v1163
      %v1220 = vadd.f32 %v1194, %v1166
      %v1221 = vadd.f32 %v1195, %v1169
      %v1222 = vadd.f32 %v1066, %v1196
      %v1223 = vadd.f32 %v1067, %v1197
      %v1224 = vadd.f32 %v1068, %v1198
      %v1225 = vadd.f32 %v1069, %v1199
      %v1226 = vadd.f32 %v1070, %v1200
      %v1227 = vadd.f32 %v1071, %v1201
      %v1228 = vadd.f32 %v1072, %v1202
      %v1229 = vadd.f32 %v1073, %v1203
      %v1230 = vadd.f32 %v1074, %v1204
      %v1231 = vadd.f32 %v1075, %v1205
      %v1232 = vadd.f32 %v1076, %v1206
      %v1233 = vadd.f32 %v1077, %v1207
      %v1234 = vadd.f32 %v1078, %v1208
      %v1235 = vadd.f32 %v1079, %v1209
      %v1236 = vadd.f32 %v1080, %v1210
      %v1237 = vadd.f32 %v1081, %v1211
      %v1238 = vadd.f32 %v1082, %v1212
      %v1239 = vadd.f32 %v1083, %v1213
      %v1240 = vadd.f32 %v1084, %v1214
      %v1241 = vadd.f32 %v1085, %v1215
      %v1242 = vadd.f32 %v1086, %v1216
      %v1243 = vadd.f32 %v1087, %v1217
      %v1244 = vadd.f32 %v1088, %v1218
      %v1245 = vadd.f32 %v1089, %v1219
      %v1246 = vadd.f32 %v1090, %v1220
      %v1247 = vadd.f32 %v1091, %v1221
      %1248 = vst [vmem:[#allocation2] sm:$0xff] %v1222
      %1249 = vst [vmem:[#allocation2 + $0x8] sm:$0xff] %v1223
      %1250 = vst [vmem:[#allocation2 + $0x10] sm:$0xff] %v1224
      %1251 = vst [vmem:[#allocation2 + $0x18] sm:$0xff] %v1225
      %1252 = vst [vmem:[#allocation2 + $0x20] sm:$0xff] %v1226
      %1253 = vst [vmem:[#allocation2 + $0x28] sm:$0xff] %v1227
      %1254 = vst [vmem:[#allocation2 + $0x30] sm:$0xff] %v1228
      %1255 = vst [vmem:[#allocation2 + $0x38] sm:$0xff] %v1229
      %1256 = vst [vmem:[#allocation2 + $0x40] sm:$0xff] %v1230
      %1257 = vst [vmem:[#allocation2 + $0x48] sm:$0xff] %v1231
      %1258 = vst [vmem:[#allocation2 + $0x50] sm:$0xff] %v1232
      %1259 = vst [vmem:[#allocation2 + $0x58] sm:$0xff] %v1233
      %1260 = vst [vmem:[#allocation2 + $0x60] sm:$0xff] %v1234
      %1261 = vst [vmem:[#allocation2 + $0x68] sm:$0xff] %v1235
      %1262 = vst [vmem:[#allocation2 + $0x70] sm:$0xff] %v1236
      %1263 = vst [vmem:[#allocation2 + $0x78] sm:$0xff] %v1237
      %1264 = vst [vmem:[#allocation2 + $0x80] sm:$0xff] %v1238
      %1265 = vst [vmem:[#allocation2 + $0x88] sm:$0xff] %v1239
      %1266 = vst [vmem:[#allocation2 + $0x90] sm:$0xff] %v1240
      %1267 = vst [vmem:[#allocation2 + $0x98] sm:$0xff] %v1241
      %1268 = vst [vmem:[#allocation2 + $0xa0] sm:$0xff] %v1242
      %1269 = vst [vmem:[#allocation2 + $0xa8] sm:$0xff] %v1243
      %1270 = vst [vmem:[#allocation2 + $0xb0] sm:$0xff] %v1244
      %1271 = vst [vmem:[#allocation2 + $0xb8] sm:$0xff] %v1245
      %1272 = vst [vmem:[#allocation2 + $0xc0] sm:$0xff] %v1246
      %1273 = vst [vmem:[#allocation2 + $0xc8] sm:$0xff] %v1247
    $region21: #{tpu_custom_call.1} parent=1 // pred_fallthru
      _
    %p1274 = pneg %p892
    // Predicated region
    $region22: #{tpu_custom_call.1} parent=1 // pred_check
      _
    $region23: #{tpu_custom_call.1} parent=1 // pred_check_branch
      %1276 = sbr.rel (%p892) target = $region25
    $region24: #{tpu_custom_call.1} parent=1 // pred_region
      %v1277 = vld [vmem:[#allocation2] sm:$0xff]
      %v1278 = vld [vmem:[#allocation2 + $0x8] sm:$0xff]
      %v1279 = vld [vmem:[#allocation2 + $0x10] sm:$0xff]
      %v1280 = vld [vmem:[#allocation2 + $0x18] sm:$0xff]
      %v1281 = vld [vmem:[#allocation2 + $0x20] sm:$0xff]
      %v1282 = vld [vmem:[#allocation2 + $0x28] sm:$0xff]
      %v1283 = vld [vmem:[#allocation2 + $0x30] sm:$0xff]
      %v1284 = vld [vmem:[#allocation2 + $0x38] sm:$0xff]
      %v1285 = vld [vmem:[#allocation2 + $0x40] sm:$0xff]
      %v1286 = vld [vmem:[#allocation2 + $0x48] sm:$0xff]
      %v1287 = vld [vmem:[#allocation2 + $0x50] sm:$0xff]
      %v1288 = vld [vmem:[#allocation2 + $0x58] sm:$0xff]
      %v1289 = vld [vmem:[#allocation2 + $0x60] sm:$0xff]
      %v1290 = vld [vmem:[#allocation2 + $0x68] sm:$0xff]
      %v1291 = vld [vmem:[#allocation2 + $0x70] sm:$0xff]
      %v1292 = vld [vmem:[#allocation2 + $0x78] sm:$0xff]
      %v1293 = vld [vmem:[#allocation2 + $0x80] sm:$0xff]
      %v1294 = vld [vmem:[#allocation2 + $0x88] sm:$0xff]
      %v1295 = vld [vmem:[#allocation2 + $0x90] sm:$0xff]
      %v1296 = vld [vmem:[#allocation2 + $0x98] sm:$0xff]
      %v1297 = vld [vmem:[#allocation2 + $0xa0] sm:$0xff]
      %v1298 = vld [vmem:[#allocation2 + $0xa8] sm:$0xff]
      %v1299 = vld [vmem:[#allocation2 + $0xb0] sm:$0xff]
      %v1300 = vld [vmem:[#allocation2 + $0xb8] sm:$0xff]
      %v1301 = vld [vmem:[#allocation2 + $0xc0] sm:$0xff]
      %v1302 = vld [vmem:[#allocation2 + $0xc8] sm:$0xff]
      %v1303 = vadd.f32 %v813, %v814
      %v1304 = vadd.f32 %v816, %v817
      %v1305 = vadd.f32 %v819, %v820
      %v1306 = vadd.f32 %v822, %v823
      %v1307 = vadd.f32 %v825, %v826
      %v1308 = vadd.f32 %v828, %v829
      %v1309 = vadd.f32 %v831, %v832
      %v1310 = vadd.f32 %v834, %v835
      %v1311 = vadd.f32 %v837, %v838
      %v1312 = vadd.f32 %v840, %v841
      %v1313 = vadd.f32 %v843, %v844
      %v1314 = vadd.f32 %v846, %v847
      %v1315 = vadd.f32 %v849, %v850
      %v1316 = vadd.f32 %v852, %v853
      %v1317 = vadd.f32 %v855, %v856
      %v1318 = vadd.f32 %v858, %v859
      %v1319 = vadd.f32 %v861, %v862
      %v1320 = vadd.f32 %v864, %v865
      %v1321 = vadd.f32 %v867, %v868
      %v1322 = vadd.f32 %v870, %v871
      %v1323 = vadd.f32 %v873, %v874
      %v1324 = vadd.f32 %v876, %v877
      %v1325 = vadd.f32 %v879, %v880
      %v1326 = vadd.f32 %v882, %v883
      %v1327 = vadd.f32 %v885, %v886
      %v1328 = vadd.f32 %v888, %v889
      %v1329 = vadd.f32 %v1303, %v815
      %v1330 = vadd.f32 %v1304, %v818
      %v1331 = vadd.f32 %v1305, %v821
      %v1332 = vadd.f32 %v1306, %v824
      %v1333 = vadd.f32 %v1307, %v827
      %v1334 = vadd.f32 %v1308, %v830
      %v1335 = vadd.f32 %v1309, %v833
      %v1336 = vadd.f32 %v1310, %v836
      %v1337 = vadd.f32 %v1311, %v839
      %v1338 = vadd.f32 %v1312, %v842
      %v1339 = vadd.f32 %v1313, %v845
      %v1340 = vadd.f32 %v1314, %v848
      %v1341 = vadd.f32 %v1315, %v851
      %v1342 = vadd.f32 %v1316, %v854
      %v1343 = vadd.f32 %v1317, %v857
      %v1344 = vadd.f32 %v1318, %v860
      %v1345 = vadd.f32 %v1319, %v863
      %v1346 = vadd.f32 %v1320, %v866
      %v1347 = vadd.f32 %v1321, %v869
      %v1348 = vadd.f32 %v1322, %v872
      %v1349 = vadd.f32 %v1323, %v875
      %v1350 = vadd.f32 %v1324, %v878
      %v1351 = vadd.f32 %v1325, %v881
      %v1352 = vadd.f32 %v1326, %v884
      %v1353 = vadd.f32 %v1327, %v887
      %v1354 = vadd.f32 %v1328, %v890
      %v1355 = vadd.f32 %v1277, %v1329
      %v1356 = vadd.f32 %v1278, %v1330
      %v1357 = vadd.f32 %v1279, %v1331
      %v1358 = vadd.f32 %v1280, %v1332
      %v1359 = vadd.f32 %v1281, %v1333
      %v1360 = vadd.f32 %v1282, %v1334
      %v1361 = vadd.f32 %v1283, %v1335
      %v1362 = vadd.f32 %v1284, %v1336
      %v1363 = vadd.f32 %v1285, %v1337
      %v1364 = vadd.f32 %v1286, %v1338
      %v1365 = vadd.f32 %v1287, %v1339
      %v1366 = vadd.f32 %v1288, %v1340
      %v1367 = vadd.f32 %v1289, %v1341
      %v1368 = vadd.f32 %v1290, %v1342
      %v1369 = vadd.f32 %v1291, %v1343
      %v1370 = vadd.f32 %v1292, %v1344
      %v1371 = vadd.f32 %v1293, %v1345
      %v1372 = vadd.f32 %v1294, %v1346
      %v1373 = vadd.f32 %v1295, %v1347
      %v1374 = vadd.f32 %v1296, %v1348
      %v1375 = vadd.f32 %v1297, %v1349
      %v1376 = vadd.f32 %v1298, %v1350
      %v1377 = vadd.f32 %v1299, %v1351
      %v1378 = vadd.f32 %v1300, %v1352
      %v1379 = vadd.f32 %v1301, %v1353
      %v1380 = vadd.f32 %v1302, %v1354
      %1381 = vst [vmem:[#allocation2] sm:$0xff] %v1355
      %1382 = vst [vmem:[#allocation2 + $0x8] sm:$0xff] %v1356
      %1383 = vst [vmem:[#allocation2 + $0x10] sm:$0xff] %v1357
      %1384 = vst [vmem:[#allocation2 + $0x18] sm:$0xff] %v1358
      %1385 = vst [vmem:[#allocation2 + $0x20] sm:$0xff] %v1359
      %1386 = vst [vmem:[#allocation2 + $0x28] sm:$0xff] %v1360
      %1387 = vst [vmem:[#allocation2 + $0x30] sm:$0xff] %v1361
      %1388 = vst [vmem:[#allocation2 + $0x38] sm:$0xff] %v1362
      %1389 = vst [vmem:[#allocation2 + $0x40] sm:$0xff] %v1363
      %1390 = vst [vmem:[#allocation2 + $0x48] sm:$0xff] %v1364
      %1391 = vst [vmem:[#allocation2 + $0x50] sm:$0xff] %v1365
      %1392 = vst [vmem:[#allocation2 + $0x58] sm:$0xff] %v1366
      %1393 = vst [vmem:[#allocation2 + $0x60] sm:$0xff] %v1367
      %1394 = vst [vmem:[#allocation2 + $0x68] sm:$0xff] %v1368
      %1395 = vst [vmem:[#allocation2 + $0x70] sm:$0xff] %v1369
      %1396 = vst [vmem:[#allocation2 + $0x78] sm:$0xff] %v1370
      %1397 = vst [vmem:[#allocation2 + $0x80] sm:$0xff] %v1371
      %1398 = vst [vmem:[#allocation2 + $0x88] sm:$0xff] %v1372
      %1399 = vst [vmem:[#allocation2 + $0x90] sm:$0xff] %v1373
      %1400 = vst [vmem:[#allocation2 + $0x98] sm:$0xff] %v1374
      %1401 = vst [vmem:[#allocation2 + $0xa0] sm:$0xff] %v1375
      %1402 = vst [vmem:[#allocation2 + $0xa8] sm:$0xff] %v1376
      %1403 = vst [vmem:[#allocation2 + $0xb0] sm:$0xff] %v1377
      %1404 = vst [vmem:[#allocation2 + $0xb8] sm:$0xff] %v1378
      %1405 = vst [vmem:[#allocation2 + $0xc0] sm:$0xff] %v1379
      %1406 = vst [vmem:[#allocation2 + $0xc8] sm:$0xff] %v1380
    $region25: #{tpu_custom_call.1} parent=1 // pred_fallthru
      _
    // Predicated region
    $region26: #{tpu_custom_call.1} parent=1 // pred_check
      %p1407 = pneg %p15
    $region27: #{tpu_custom_call.1} parent=1 // pred_check_branch
      %1409 = sbr.rel (%p1407) target = $region29
    $region28: #{tpu_custom_call.1} parent=1 // pred_region
      %v1410 = vld [vmem:[#allocation2] sm:$0xff]
      %v1411 = vld [vmem:[#allocation2 + $0x8] sm:$0xff]
      %v1412 = vld [vmem:[#allocation2 + $0x10] sm:$0xff]
      %v1413 = vld [vmem:[#allocation2 + $0x18] sm:$0xff]
      %v1414 = vld [vmem:[#allocation2 + $0x20] sm:$0xff]
      %v1415 = vld [vmem:[#allocation2 + $0x28] sm:$0xff]
      %v1416 = vld [vmem:[#allocation2 + $0x30] sm:$0xff]
      %v1417 = vld [vmem:[#allocation2 + $0x38] sm:$0xff]
      %v1418 = vld [vmem:[#allocation2 + $0x40] sm:$0xff]
      %v1419 = vld [vmem:[#allocation2 + $0x48] sm:$0xff]
      %v1420 = vld [vmem:[#allocation2 + $0x50] sm:$0xff]
      %v1421 = vld [vmem:[#allocation2 + $0x58] sm:$0xff]
      %v1422 = vld [vmem:[#allocation2 + $0x60] sm:$0xff]
      %v1423 = vld [vmem:[#allocation2 + $0x68] sm:$0xff]
      %v1424 = vld [vmem:[#allocation2 + $0x70] sm:$0xff]
      %v1425 = vld [vmem:[#allocation2 + $0x78] sm:$0xff]
      %v1426 = vld [vmem:[#allocation2 + $0x80] sm:$0xff]
      %v1427 = vld [vmem:[#allocation2 + $0x88] sm:$0xff]
      %v1428 = vld [vmem:[#allocation2 + $0x90] sm:$0xff]
      %v1429 = vld [vmem:[#allocation2 + $0x98] sm:$0xff]
      %v1430 = vld [vmem:[#allocation2 + $0xa0] sm:$0xff]
      %v1431 = vld [vmem:[#allocation2 + $0xa8] sm:$0xff]
      %v1432 = vld [vmem:[#allocation2 + $0xb0] sm:$0xff]
      %v1433 = vld [vmem:[#allocation2 + $0xb8] sm:$0xff]
      %v1434 = vld [vmem:[#allocation2 + $0xc0] sm:$0xff]
      %v1435 = vld [vmem:[#allocation2 + $0xc8] sm:$0xff]
      %v1436 = vadd.f32 %v1410, %v1411
      %v1437 = vadd.f32 %v1436, %v1412
      %v1438 = vadd.f32 %v1437, %v1413
      %v1439 = vadd.f32 %v1438, %v1414
      %v1440 = vadd.f32 %v1439, %v1415
      %v1441 = vadd.f32 %v1440, %v1416
      %v1442 = vadd.f32 %v1441, %v1417
      %v1443 = vadd.f32 %v1442, %v1418
      %v1444 = vadd.f32 %v1443, %v1419
      %v1445 = vadd.f32 %v1444, %v1420
      %v1446 = vadd.f32 %v1445, %v1421
      %v1447 = vadd.f32 %v1446, %v1422
      %v1448 = vadd.f32 %v1447, %v1423
      %v1449 = vadd.f32 %v1448, %v1424
      %v1450 = vadd.f32 %v1449, %v1425
      %v1451 = vadd.f32 %v1450, %v1426
      %v1452 = vadd.f32 %v1451, %v1427
      %v1453 = vadd.f32 %v1452, %v1428
      %v1454 = vadd.f32 %v1453, %v1429
      %v1455 = vadd.f32 %v1454, %v1430
      %v1456 = vadd.f32 %v1455, %v1431
      %v1457 = vadd.f32 %v1456, %v1432
      %v1458 = vadd.f32 %v1457, %v1433
      %v1459 = vadd.f32 %v1458, %v1434
      %v1460 = vadd.f32 %v1459, %v1435
      %1461 = vst [vmem:[#allocation3] sm:$0xff] %v1460
    $region29: #{tpu_custom_call.1} parent=1 // pred_fallthru
      _
    // Predicated region
    $region30: #{tpu_custom_call.1} parent=1 // pred_check
      _
    $region31: #{tpu_custom_call.1} parent=1 // pred_check_branch
      %1463 = sbr.rel (0) target = $region33
    $region32: #{tpu_custom_call.1} parent=1 // pred_region
      %1465 = vsyncadd [#allocation4], 0
      %s1467 = sshll.u32 [#allocation3], 4
      %s1468 = int_to_ptr.vmem [resolvable:$true] %s1467
      %s1469 = sshll.u32 %s3, 4
      %s1470 = int_to_ptr.hbm [resolvable:$true] %s1469
      %1472 = dma.vmem_to_hbm [thread:$0]  %s1468, 128, %s1470, [#allocation4]
    $region33: #{tpu_custom_call.1} parent=1 // pred_fallthru
      _
    // Predicated region
    $region34: #{tpu_custom_call.1} parent=1 // pred_check
      _
    $region35: #{tpu_custom_call.1} parent=1 // pred_check_branch
      %1474 = sbr.rel (0) target = $region37
    $region36: #{tpu_custom_call.1} parent=1 // pred_region
      %1476 = dma.done [#allocation4], 128
    $region37: #{tpu_custom_call.1} parent=1 // pred_fallthru
      _
    %1477 = vsyncpa [#allocation4], 1

</llo_original>
